<compile_context>
chip_gen: v7x
topology: tpu7x:2x2x1
jax: 0.10.0
libtpu: 0.0.40
codegen_flags: <defaults>
</compile_context>

<pallas_src>
import jax
import jax.numpy as jnp
from jax.experimental import pallas as pl
from jax.experimental.pallas import tpu as pltpu


# ----------------------------------------------------------------------------
# helpers
# ----------------------------------------------------------------------------
def _round_up(x, m):
    return (x + m - 1) // m * m


def _largest_divisor_leq(n, cap):
    for d in range(min(n, cap), 0, -1):
        if n % d == 0:
            return d
    return 1


# ----------------------------------------------------------------------------
# fused kernel: 3x3 conv (9 shifted matmuls) + bias + ReLU + avg-pool + Linear
# ----------------------------------------------------------------------------
def _make_fused_kernel(th, w, hw):
    """th: output rows per spatial tile, w: image width, hw: H*W (pool divisor)."""
    wp = w + 2                 # padded width
    m_rows = th * wp           # matmul rows per tile (over-computed by (W+2)/W)
    inv_hw = 1.0 / float(hw)

    def kernel(x_ref, mask_ref, wc_ref, bc_ref, we_ref, be_ref, o_ref, acc_ref):
        # grid = (batch, spatial_tile); batch is "parallel", spatial_tile "arbitrary".
        t = pl.program_id(1)

        @pl.when(t == 0)
        def _init():
            acc_ref[...] = jnp.zeros_like(acc_ref)

        row0 = t * th
        cout_p = wc_ref.shape[-1]

        # 3x3 conv as 9 shifted matmuls accumulated in f32.  x_ref is the flattened,
        # zero-haloed, channels-last pixel slab of ONE image: (n_pix_padded, Cin_p).
        # For shift (kh, kw) the rows needed for this tile form one contiguous slice.
        conv = jnp.zeros((m_rows, cout_p), jnp.float32)
        for k in range(9):
            kh, kw = k // 3, k % 3
            p0 = (row0 + kh) * wp + kw
            lhs = x_ref[pl.ds(p0, m_rows), :]                    # (m_rows, Cin_p)
            conv = conv + jnp.dot(lhs, wc_ref[k],
                                  preferred_element_type=jnp.float32)

        # bias + ReLU in f32; mask kills the over-computed padding columns, then the
        # tile's contribution to the global average pool is accumulated in VMEM.
        feat = jnp.maximum(conv + bc_ref[...], 0.0)              # (m_rows, Cout_p) f32
        acc_ref[...] += jnp.sum(feat * mask_ref[...], axis=0, keepdims=True)

        @pl.when(t == pl.num_programs(1) - 1)
        def _finalize():
            pooled = acc_ref[...] * inv_hw                       # (1, Cout_p) f32
            emb = jnp.dot(pooled.astype(we_ref.dtype), we_ref[...],
                          preferred_element_type=jnp.float32) + be_ref[...]
            o_ref[...] = emb.astype(o_ref.dtype)                 # lane-dense (1, E_p)

    return kernel


# ----------------------------------------------------------------------------
# EncoderCNN forward
# ----------------------------------------------------------------------------
def encoder_cnn_forward(images, params, *, compute_dtype=jnp.float32, row_tile=None):
    """images: (B, C, H, W) NCHW (PyTorch convention) -> (B, embed_size)."""
    B, C, H, W = images.shape
    conv_w, conv_b = params["conv_w"], params["conv_b"]          # (Cout,C,3,3), (Cout,)
    embed_w, embed_b = params["embed_w"], params["embed_b"]      # (E,Cout), (E,)
    Cout = conv_w.shape[0]
    E = embed_w.shape[0]

    cin_p = _round_up(C, 8)           # sublane-align the contraction dim
    cout_p = _round_up(Cout, 128)     # lane-dense feature channels
    e_p = _round_up(E, 128)           # lane-dense embedding output

    if row_tile is None:
        # target ~512 matmul rows per spatial tile (tile-sweep: ~85% of HBM roofline).
        row_tile = max(1, 512 // (W + 2))
    th = _largest_divisor_leq(H, row_tile)
    n_t = H // th
    m_rows = th * (W + 2)

    n_pix = (H + 2) * (W + 2)
    n_pix_p = _round_up(n_pix + 2, 8)  # +2 rows of zeros so shifted slices stay in-bounds

    # ---- cheap plain-JAX prep (raw input only; the feature map never hits HBM) ----
    x = jnp.transpose(images, (0, 2, 3, 1)).astype(compute_dtype)      # NHWC
    x = jnp.pad(x, ((0, 0), (1, 1), (1, 1), (0, cin_p - C)))           # zero halo
    x = x.reshape(B, n_pix, cin_p)
    x = jnp.pad(x, ((0, 0), (0, n_pix_p - n_pix), (0, 0)))             # (B, n_pix_p, Cin_p)

    wc = jnp.transpose(conv_w, (2, 3, 1, 0))                           # (3,3,C,Cout)
    wc = jnp.pad(wc, ((0, 0), (0, 0), (0, cin_p - C), (0, cout_p - Cout)))
    wc = wc.reshape(9, cin_p, cout_p).astype(compute_dtype)
    bc = jnp.pad(conv_b, (0, cout_p - Cout)).reshape(1, cout_p).astype(jnp.float32)

    we = jnp.pad(embed_w.T, ((0, cout_p - Cout), (0, e_p - E))).astype(compute_dtype)
    be = jnp.pad(embed_b, (0, e_p - E)).reshape(1, e_p).astype(jnp.float32)

    # valid-column mask for the (th, W+2) over-computed conv tile (same for every tile).
    mask = (jnp.arange(m_rows) % (W + 2) < W).astype(jnp.float32).reshape(m_rows, 1)

    kernel = _make_fused_kernel(th, W, H * W)

    out = pl.pallas_call(
        kernel,
        out_shape=jax.ShapeDtypeStruct((B, 1, e_p), jnp.float32),
        grid_spec=pltpu.PrefetchScalarGridSpec(
            num_scalar_prefetch=0,
            grid=(B, n_t),
            in_specs=[
                # per-batch flattened pixel slab; constant over t -> DMA'd once / image
                pl.BlockSpec((None, n_pix_p, cin_p), lambda b, t: (b, 0, 0)),
                pl.BlockSpec((m_rows, 1), lambda b, t: (0, 0)),
                pl.BlockSpec((9, cin_p, cout_p), lambda b, t: (0, 0, 0)),
                pl.BlockSpec((1, cout_p), lambda b, t: (0, 0)),
                pl.BlockSpec((cout_p, e_p), lambda b, t: (0, 0)),
                pl.BlockSpec((1, e_p), lambda b, t: (0, 0)),
            ],
            out_specs=pl.BlockSpec((None, 1, e_p), lambda b, t: (b, 0, 0)),
            scratch_shapes=[pltpu.VMEM((1, cout_p), jnp.float32)],      # pooled-sum acc
        ),
        compiler_params=pltpu.CompilerParams(
            dimension_semantics=("parallel", "arbitrary"),
            vmem_limit_bytes=32 * 1024 * 1024,
        ),
    )(x, mask, wc, bc, we, be)

    return out.reshape(B, e_p)[:, :E].astype(images.dtype)


# ----------------------------------------------------------------------------
# params + pure-JAX reference
# ----------------------------------------------------------------------------
def init_params(key, c_in, c_feat, embed_size, dtype=jnp.float32):
    k1, k2, k3, k4 = jax.random.split(key, 4)
    return {
        "conv_w": jax.random.normal(k1, (c_feat, c_in, 3, 3), dtype) * 0.1,
        "conv_b": jax.random.normal(k2, (c_feat,), dtype) * 0.1,
        "embed_w": jax.random.normal(k3, (embed_size, c_feat), dtype) * 0.1,
        "embed_b": jax.random.normal(k4, (embed_size,), dtype) * 0.1,
    }


def _reference_forward(images, params):
    w, b = params["conv_w"], params["conv_b"]
    out = jax.lax.conv_general_dilated(
        images, w, window_strides=(1, 1), padding="SAME",
        dimension_numbers=("NCHW", "OIHW", "NCHW"))
    out = jnp.maximum(out + b[None, :, None, None], 0.0)
    pooled = out.mean(axis=(2, 3))                               # AdaptiveAvgPool2d(1)
    return pooled @ params["embed_w"].T + params["embed_b"]


if __name__ == "__main__":
    B, C_in, H, W = 2, 4, 16, 16       # images: (2, 4, 16, 16)
    C_feat = 32                        # stand-in for resnet.fc.in_features (2048)
    embed_size = 32

    key = jax.random.PRNGKey(0)
    k_img, k_par = jax.random.split(key)
    images = jax.random.normal(k_img, (B, C_in, H, W), jnp.float32)
    params = init_params(k_par, C_in, C_feat, embed_size)

    ref = _reference_forward(images, params)

    # small spatial tile -> 2 grid steps per image: exercises init/accumulate/finalize.
    out_tiled = jax.block_until_ready(encoder_cnn_forward(images, params, row_tile=8))
    assert out_tiled.shape == (B, embed_size)
    assert jnp.allclose(out_tiled, ref, rtol=1e-4, atol=1e-4), "mismatch (tiled)"

    # default (auto) tile size: single spatial tile per image.
    out_auto = jax.block_until_ready(encoder_cnn_forward(images, params))
    assert jnp.allclose(out_auto, ref, rtol=1e-4, atol=1e-4), "mismatch (auto tile)"

    print("KERNEL_OK")
</pallas_src>

<mosaic_0001>
module attributes {stable_mosaic.version = 11 : i64} {
  func.func @kernel(%arg0: i32, %arg1: i32, %arg2: memref<1x328x8xf32, #tpu.memory_space<vmem>>, %arg3: memref<144x1xf32, #tpu.memory_space<vmem>>, %arg4: memref<9x8x128xf32, #tpu.memory_space<vmem>>, %arg5: memref<1x128xf32, #tpu.memory_space<vmem>>, %arg6: memref<128x128xf32, #tpu.memory_space<vmem>>, %arg7: memref<1x128xf32, #tpu.memory_space<vmem>>, %arg8: memref<1x1x128xf32, #tpu.memory_space<vmem>>, %arg9: memref<1x128xf32, #tpu.memory_space<vmem>>) attributes {dimension_semantics = [#tpu.dimension_semantics<parallel>, #tpu.dimension_semantics<arbitrary>], iteration_bounds = array<i64: 2, 2>, scalar_prefetch = 0 : i64, scratch_operands = 1 : i64, tpu.core_type = #tpu.core_type<tc>, window_params = [{transform_indices = @transform_0, window_bounds = array<i64: 1, 328, 8>}, {pipeline_mode = #tpu.pipeline_mode<synchronous>, transform_indices = @transform_1, window_bounds = array<i64: 144, 1>}, {pipeline_mode = #tpu.pipeline_mode<synchronous>, transform_indices = @transform_2, window_bounds = array<i64: 9, 8, 128>}, {pipeline_mode = #tpu.pipeline_mode<synchronous>, transform_indices = @transform_3, window_bounds = array<i64: 1, 128>}, {pipeline_mode = #tpu.pipeline_mode<synchronous>, transform_indices = @transform_4, window_bounds = array<i64: 128, 128>}, {pipeline_mode = #tpu.pipeline_mode<synchronous>, transform_indices = @transform_5, window_bounds = array<i64: 1, 128>}, {transform_indices = @transform_6, window_bounds = array<i64: 1, 1, 128>}]} {
    %c0_i32 = arith.constant 0 : i32
    %0 = arith.cmpi eq, %arg1, %c0_i32 : i32
    %1 = arith.extui %0 : i1 to i32
    %c0_i32_0 = arith.constant 0 : i32
    %2 = arith.cmpi ne, %1, %c0_i32_0 : i32
    scf.if %2 {
      %cst_82 = arith.constant 0.000000e+00 : f32
      %111 = vector.broadcast %cst_82 : f32 to vector<1x128xf32>
      %c0_83 = arith.constant 0 : index
      %c0_84 = arith.constant 0 : index
      %112 = vector.load %arg9[%c0_83, %c0_84] : memref<1x128xf32, #tpu.memory_space<vmem>>, vector<1x128xf32>
      tpu.vector_store %arg9[%c0_83, %c0_84], %111 {strides = array<i32>} : memref<1x128xf32, #tpu.memory_space<vmem>>, vector<1x128xf32>,
    } else {
    }
    %c8_i32 = arith.constant 8 : i32
    %3 = arith.muli %arg1, %c8_i32 : i32
    %cst = arith.constant 0.000000e+00 : f32
    %4 = vector.broadcast %cst : f32 to vector<144x128xf32>
    %c0_i32_1 = arith.constant 0 : i32
    %5 = arith.addi %3, %c0_i32_1 : i32
    %c18_i32 = arith.constant 18 : i32
    %6 = arith.muli %5, %c18_i32 : i32
    %c0_i32_2 = arith.constant 0 : i32
    %7 = arith.addi %6, %c0_i32_2 : i32
    %c0 = arith.constant 0 : index
    %8 = arith.index_cast %7 : i32 to index
    %c0_3 = arith.constant 0 : index
    %9 = vector.load %arg2[%c0, %8, %c0_3] : memref<1x328x8xf32, #tpu.memory_space<vmem>>, vector<1x144x8xf32>
    %10 = vector.shape_cast %9 : vector<1x144x8xf32> to vector<144x8xf32>
    %c0_4 = arith.constant 0 : index
    %c0_5 = arith.constant 0 : index
    %c0_6 = arith.constant 0 : index
    %11 = vector.load %arg4[%c0_4, %c0_5, %c0_6] : memref<9x8x128xf32, #tpu.memory_space<vmem>>, vector<1x8x128xf32>
    %12 = vector.shape_cast %11 : vector<1x8x128xf32> to vector<8x128xf32>
    %cst_7 = arith.constant dense<0.000000e+00> : vector<144x128xf32>
    %13 = tpu.matmul %10, %12, %cst_7 {dimension_numbers = #tpu.dot_dimension_numbers<[1], [0], [0], [1], [0, 0, 1, 1], [], []>} : vector<144x8xf32>, vector<8x128xf32>, vector<144x128xf32> -> vector<144x128xf32>
    %14 = arith.addf %4, %13 : vector<144x128xf32>
    %c0_i32_8 = arith.constant 0 : i32
    %15 = arith.addi %3, %c0_i32_8 : i32
    %c18_i32_9 = arith.constant 18 : i32
    %16 = arith.muli %15, %c18_i32_9 : i32
    %c1_i32 = arith.constant 1 : i32
    %17 = arith.addi %16, %c1_i32 : i32
    %c0_10 = arith.constant 0 : index
    %18 = arith.index_cast %17 : i32 to index
    %c0_11 = arith.constant 0 : index
    %19 = vector.load %arg2[%c0_10, %18, %c0_11] : memref<1x328x8xf32, #tpu.memory_space<vmem>>, vector<1x144x8xf32>
    %20 = vector.shape_cast %19 : vector<1x144x8xf32> to vector<144x8xf32>
    %c1 = arith.constant 1 : index
    %c0_12 = arith.constant 0 : index
    %c0_13 = arith.constant 0 : index
    %21 = vector.load %arg4[%c1, %c0_12, %c0_13] : memref<9x8x128xf32, #tpu.memory_space<vmem>>, vector<1x8x128xf32>
    %22 = vector.shape_cast %21 : vector<1x8x128xf32> to vector<8x128xf32>
    %cst_14 = arith.constant dense<0.000000e+00> : vector<144x128xf32>
    %23 = tpu.matmul %20, %22, %cst_14 {dimension_numbers = #tpu.dot_dimension_numbers<[1], [0], [0], [1], [0, 0, 1, 1], [], []>} : vector<144x8xf32>, vector<8x128xf32>, vector<144x128xf32> -> vector<144x128xf32>
    %24 = arith.addf %14, %23 : vector<144x128xf32>
    %c0_i32_15 = arith.constant 0 : i32
    %25 = arith.addi %3, %c0_i32_15 : i32
    %c18_i32_16 = arith.constant 18 : i32
    %26 = arith.muli %25, %c18_i32_16 : i32
    %c2_i32 = arith.constant 2 : i32
    %27 = arith.addi %26, %c2_i32 : i32
    %c0_17 = arith.constant 0 : index
    %28 = arith.index_cast %27 : i32 to index
    %c0_18 = arith.constant 0 : index
    %29 = vector.load %arg2[%c0_17, %28, %c0_18] : memref<1x328x8xf32, #tpu.memory_space<vmem>>, vector<1x144x8xf32>
    %30 = vector.shape_cast %29 : vector<1x144x8xf32> to vector<144x8xf32>
    %c2 = arith.constant 2 : index
    %c0_19 = arith.constant 0 : index
    %c0_20 = arith.constant 0 : index
    %31 = vector.load %arg4[%c2, %c0_19, %c0_20] : memref<9x8x128xf32, #tpu.memory_space<vmem>>, vector<1x8x128xf32>
    %32 = vector.shape_cast %31 : vector<1x8x128xf32> to vector<8x128xf32>
    %cst_21 = arith.constant dense<0.000000e+00> : vector<144x128xf32>
    %33 = tpu.matmul %30, %32, %cst_21 {dimension_numbers = #tpu.dot_dimension_numbers<[1], [0], [0], [1], [0, 0, 1, 1], [], []>} : vector<144x8xf32>, vector<8x128xf32>, vector<144x128xf32> -> vector<144x128xf32>
    %34 = arith.addf %24, %33 : vector<144x128xf32>
    %c1_i32_22 = arith.constant 1 : i32
    %35 = arith.addi %3, %c1_i32_22 : i32
    %c18_i32_23 = arith.constant 18 : i32
    %36 = arith.muli %35, %c18_i32_23 : i32
    %c0_i32_24 = arith.constant 0 : i32
    %37 = arith.addi %36, %c0_i32_24 : i32
    %c0_25 = arith.constant 0 : index
    %38 = arith.index_cast %37 : i32 to index
    %c0_26 = arith.constant 0 : index
    %39 = vector.load %arg2[%c0_25, %38, %c0_26] : memref<1x328x8xf32, #tpu.memory_space<vmem>>, vector<1x144x8xf32>
    %40 = vector.shape_cast %39 : vector<1x144x8xf32> to vector<144x8xf32>
    %c3 = arith.constant 3 : index
    %c0_27 = arith.constant 0 : index
    %c0_28 = arith.constant 0 : index
    %41 = vector.load %arg4[%c3, %c0_27, %c0_28] : memref<9x8x128xf32, #tpu.memory_space<vmem>>, vector<1x8x128xf32>
    %42 = vector.shape_cast %41 : vector<1x8x128xf32> to vector<8x128xf32>
    %cst_29 = arith.constant dense<0.000000e+00> : vector<144x128xf32>
    %43 = tpu.matmul %40, %42, %cst_29 {dimension_numbers = #tpu.dot_dimension_numbers<[1], [0], [0], [1], [0, 0, 1, 1], [], []>} : vector<144x8xf32>, vector<8x128xf32>, vector<144x128xf32> -> vector<144x128xf32>
    %44 = arith.addf %34, %43 : vector<144x128xf32>
    %c1_i32_30 = arith.constant 1 : i32
    %45 = arith.addi %3, %c1_i32_30 : i32
    %c18_i32_31 = arith.constant 18 : i32
    %46 = arith.muli %45, %c18_i32_31 : i32
    %c1_i32_32 = arith.constant 1 : i32
    %47 = arith.addi %46, %c1_i32_32 : i32
    %c0_33 = arith.constant 0 : index
    %48 = arith.index_cast %47 : i32 to index
    %c0_34 = arith.constant 0 : index
    %49 = vector.load %arg2[%c0_33, %48, %c0_34] : memref<1x328x8xf32, #tpu.memory_space<vmem>>, vector<1x144x8xf32>
    %50 = vector.shape_cast %49 : vector<1x144x8xf32> to vector<144x8xf32>
    %c4 = arith.constant 4 : index
    %c0_35 = arith.constant 0 : index
    %c0_36 = arith.constant 0 : index
    %51 = vector.load %arg4[%c4, %c0_35, %c0_36] : memref<9x8x128xf32, #tpu.memory_space<vmem>>, vector<1x8x128xf32>
    %52 = vector.shape_cast %51 : vector<1x8x128xf32> to vector<8x128xf32>
    %cst_37 = arith.constant dense<0.000000e+00> : vector<144x128xf32>
    %53 = tpu.matmul %50, %52, %cst_37 {dimension_numbers = #tpu.dot_dimension_numbers<[1], [0], [0], [1], [0, 0, 1, 1], [], []>} : vector<144x8xf32>, vector<8x128xf32>, vector<144x128xf32> -> vector<144x128xf32>
    %54 = arith.addf %44, %53 : vector<144x128xf32>
    %c1_i32_38 = arith.constant 1 : i32
    %55 = arith.addi %3, %c1_i32_38 : i32
    %c18_i32_39 = arith.constant 18 : i32
    %56 = arith.muli %55, %c18_i32_39 : i32
    %c2_i32_40 = arith.constant 2 : i32
    %57 = arith.addi %56, %c2_i32_40 : i32
    %c0_41 = arith.constant 0 : index
    %58 = arith.index_cast %57 : i32 to index
    %c0_42 = arith.constant 0 : index
    %59 = vector.load %arg2[%c0_41, %58, %c0_42] : memref<1x328x8xf32, #tpu.memory_space<vmem>>, vector<1x144x8xf32>
    %60 = vector.shape_cast %59 : vector<1x144x8xf32> to vector<144x8xf32>
    %c5 = arith.constant 5 : index
    %c0_43 = arith.constant 0 : index
    %c0_44 = arith.constant 0 : index
    %61 = vector.load %arg4[%c5, %c0_43, %c0_44] : memref<9x8x128xf32, #tpu.memory_space<vmem>>, vector<1x8x128xf32>
    %62 = vector.shape_cast %61 : vector<1x8x128xf32> to vector<8x128xf32>
    %cst_45 = arith.constant dense<0.000000e+00> : vector<144x128xf32>
    %63 = tpu.matmul %60, %62, %cst_45 {dimension_numbers = #tpu.dot_dimension_numbers<[1], [0], [0], [1], [0, 0, 1, 1], [], []>} : vector<144x8xf32>, vector<8x128xf32>, vector<144x128xf32> -> vector<144x128xf32>
    %64 = arith.addf %54, %63 : vector<144x128xf32>
    %c2_i32_46 = arith.constant 2 : i32
    %65 = arith.addi %3, %c2_i32_46 : i32
    %c18_i32_47 = arith.constant 18 : i32
    %66 = arith.muli %65, %c18_i32_47 : i32
    %c0_i32_48 = arith.constant 0 : i32
    %67 = arith.addi %66, %c0_i32_48 : i32
    %c0_49 = arith.constant 0 : index
    %68 = arith.index_cast %67 : i32 to index
    %c0_50 = arith.constant 0 : index
    %69 = vector.load %arg2[%c0_49, %68, %c0_50] : memref<1x328x8xf32, #tpu.memory_space<vmem>>, vector<1x144x8xf32>
    %70 = vector.shape_cast %69 : vector<1x144x8xf32> to vector<144x8xf32>
    %c6 = arith.constant 6 : index
    %c0_51 = arith.constant 0 : index
    %c0_52 = arith.constant 0 : index
    %71 = vector.load %arg4[%c6, %c0_51, %c0_52] : memref<9x8x128xf32, #tpu.memory_space<vmem>>, vector<1x8x128xf32>
    %72 = vector.shape_cast %71 : vector<1x8x128xf32> to vector<8x128xf32>
    %cst_53 = arith.constant dense<0.000000e+00> : vector<144x128xf32>
    %73 = tpu.matmul %70, %72, %cst_53 {dimension_numbers = #tpu.dot_dimension_numbers<[1], [0], [0], [1], [0, 0, 1, 1], [], []>} : vector<144x8xf32>, vector<8x128xf32>, vector<144x128xf32> -> vector<144x128xf32>
    %74 = arith.addf %64, %73 : vector<144x128xf32>
    %c2_i32_54 = arith.constant 2 : i32
    %75 = arith.addi %3, %c2_i32_54 : i32
    %c18_i32_55 = arith.constant 18 : i32
    %76 = arith.muli %75, %c18_i32_55 : i32
    %c1_i32_56 = arith.constant 1 : i32
    %77 = arith.addi %76, %c1_i32_56 : i32
    %c0_57 = arith.constant 0 : index
    %78 = arith.index_cast %77 : i32 to index
    %c0_58 = arith.constant 0 : index
    %79 = vector.load %arg2[%c0_57, %78, %c0_58] : memref<1x328x8xf32, #tpu.memory_space<vmem>>, vector<1x144x8xf32>
    %80 = vector.shape_cast %79 : vector<1x144x8xf32> to vector<144x8xf32>
    %c7 = arith.constant 7 : index
    %c0_59 = arith.constant 0 : index
    %c0_60 = arith.constant 0 : index
    %81 = vector.load %arg4[%c7, %c0_59, %c0_60] : memref<9x8x128xf32, #tpu.memory_space<vmem>>, vector<1x8x128xf32>
    %82 = vector.shape_cast %81 : vector<1x8x128xf32> to vector<8x128xf32>
    %cst_61 = arith.constant dense<0.000000e+00> : vector<144x128xf32>
    %83 = tpu.matmul %80, %82, %cst_61 {dimension_numbers = #tpu.dot_dimension_numbers<[1], [0], [0], [1], [0, 0, 1, 1], [], []>} : vector<144x8xf32>, vector<8x128xf32>, vector<144x128xf32> -> vector<144x128xf32>
    %84 = arith.addf %74, %83 : vector<144x128xf32>
    %c2_i32_62 = arith.constant 2 : i32
    %85 = arith.addi %3, %c2_i32_62 : i32
    %c18_i32_63 = arith.constant 18 : i32
    %86 = arith.muli %85, %c18_i32_63 : i32
    %c2_i32_64 = arith.constant 2 : i32
    %87 = arith.addi %86, %c2_i32_64 : i32
    %c0_65 = arith.constant 0 : index
    %88 = arith.index_cast %87 : i32 to index
    %c0_66 = arith.constant 0 : index
    %89 = vector.load %arg2[%c0_65, %88, %c0_66] : memref<1x328x8xf32, #tpu.memory_space<vmem>>, vector<1x144x8xf32>
    %90 = vector.shape_cast %89 : vector<1x144x8xf32> to vector<144x8xf32>
    %c8 = arith.constant 8 : index
    %c0_67 = arith.constant 0 : index
    %c0_68 = arith.constant 0 : index
    %91 = vector.load %arg4[%c8, %c0_67, %c0_68] : memref<9x8x128xf32, #tpu.memory_space<vmem>>, vector<1x8x128xf32>
    %92 = vector.shape_cast %91 : vector<1x8x128xf32> to vector<8x128xf32>
    %cst_69 = arith.constant dense<0.000000e+00> : vector<144x128xf32>
    %93 = tpu.matmul %90, %92, %cst_69 {dimension_numbers = #tpu.dot_dimension_numbers<[1], [0], [0], [1], [0, 0, 1, 1], [], []>} : vector<144x8xf32>, vector<8x128xf32>, vector<144x128xf32> -> vector<144x128xf32>
    %94 = arith.addf %84, %93 : vector<144x128xf32>
    %c0_70 = arith.constant 0 : index
    %c0_71 = arith.constant 0 : index
    %95 = vector.load %arg5[%c0_70, %c0_71] : memref<1x128xf32, #tpu.memory_space<vmem>>, vector<1x128xf32>
    %96 = vector.broadcast %95 : vector<1x128xf32> to vector<144x128xf32>
    %97 = arith.addf %94, %96 : vector<144x128xf32>
    %cst_72 = arith.constant 0.000000e+00 : f32
    %98 = vector.broadcast %cst_72 : f32 to vector<144x128xf32>
    %99 = arith.maximumf %97, %98 : vector<144x128xf32>
    %c0_73 = arith.constant 0 : index
    %c0_74 = arith.constant 0 : index
    %100 = vector.load %arg9[%c0_73, %c0_74] : memref<1x128xf32, #tpu.memory_space<vmem>>, vector<1x128xf32>
    %c0_75 = arith.constant 0 : index
    %c0_76 = arith.constant 0 : index
    %101 = vector.load %arg3[%c0_75, %c0_76] : memref<144x1xf32, #tpu.memory_space<vmem>>, vector<144x1xf32>
    %102 = vector.broadcast %101 : vector<144x1xf32> to vector<144x128xf32>
    %103 = arith.mulf %99, %102 : vector<144x128xf32>
    %cst_77 = arith.constant dense<0.000000e+00> : vector<128xf32>
    %104 = vector.multi_reduction <add>, %103, %cst_77 [0] : vector<144x128xf32> to vector<128xf32>
    %105 = vector.shape_cast %104 : vector<128xf32> to vector<1x128xf32>
    %106 = arith.addf %100, %105 : vector<1x128xf32>
    %c0_78 = arith.constant 0 : index
    %c0_79 = arith.constant 0 : index
    %107 = vector.load %arg9[%c0_78, %c0_79] : memref<1x128xf32, #tpu.memory_space<vmem>>, vector<1x128xf32>
    tpu.vector_store %arg9[%c0_78, %c0_79], %106 {strides = array<i32>} : memref<1x128xf32, #tpu.memory_space<vmem>>, vector<1x128xf32>,
    %c1_i32_80 = arith.constant 1 : i32
    %108 = arith.cmpi eq, %arg1, %c1_i32_80 : i32
    %109 = arith.extui %108 : i1 to i32
    %c0_i32_81 = arith.constant 0 : i32
    %110 = arith.cmpi ne, %109, %c0_i32_81 : i32
    scf.if %110 {
      %c0_82 = arith.constant 0 : index
      %c0_83 = arith.constant 0 : index
      %111 = vector.load %arg9[%c0_82, %c0_83] : memref<1x128xf32, #tpu.memory_space<vmem>>, vector<1x128xf32>
      %cst_84 = arith.constant 3.906250e-03 : f32
      %112 = vector.broadcast %cst_84 : f32 to vector<1x128xf32>
      %113 = arith.mulf %111, %112 : vector<1x128xf32>
      %c0_85 = arith.constant 0 : index
      %c0_86 = arith.constant 0 : index
      %114 = vector.load %arg6[%c0_85, %c0_86] : memref<128x128xf32, #tpu.memory_space<vmem>>, vector<128x128xf32>
      %cst_87 = arith.constant dense<0.000000e+00> : vector<1x128xf32>
      %115 = tpu.matmul %113, %114, %cst_87 {dimension_numbers = #tpu.dot_dimension_numbers<[1], [0], [0], [1], [0, 0, 1, 1], [], []>} : vector<1x128xf32>, vector<128x128xf32>, vector<1x128xf32> -> vector<1x128xf32>
      %c0_88 = arith.constant 0 : index
      %c0_89 = arith.constant 0 : index
      %116 = vector.load %arg7[%c0_88, %c0_89] : memref<1x128xf32, #tpu.memory_space<vmem>>, vector<1x128xf32>
      %117 = arith.addf %115, %116 : vector<1x128xf32>
      %c0_90 = arith.constant 0 : index
      %c0_91 = arith.constant 0 : index
      %c0_92 = arith.constant 0 : index
      %118 = vector.load %arg8[%c0_90, %c0_91, %c0_92] : memref<1x1x128xf32, #tpu.memory_space<vmem>>, vector<1x1x128xf32>
      %119 = vector.shape_cast %118 : vector<1x1x128xf32> to vector<1x128xf32>
      %120 = vector.shape_cast %117 : vector<1x128xf32> to vector<1x1x128xf32>
      tpu.vector_store %arg8[%c0_90, %c0_91, %c0_92], %120 {strides = array<i32>} : memref<1x1x128xf32, #tpu.memory_space<vmem>>, vector<1x1x128xf32>,
    } else {
    }
    return
  }
  func.func @transform_0(%arg0: i32, %arg1: i32) -> (i32, i32, i32) {
    %c0_i32 = arith.constant 0 : i32
    %c0_i32_0 = arith.constant 0 : i32
    %c0_i32_1 = arith.constant 0 : i32
    return %arg0, %c0_i32, %c0_i32_0 : i32, i32, i32
  }
  func.func @transform_1(%arg0: i32, %arg1: i32) -> (i32, i32) {
    %c0_i32 = arith.constant 0 : i32
    %c0_i32_0 = arith.constant 0 : i32
    %c0_i32_1 = arith.constant 0 : i32
    return %c0_i32, %c0_i32_0 : i32, i32
  }
  func.func @transform_2(%arg0: i32, %arg1: i32) -> (i32, i32, i32) {
    %c0_i32 = arith.constant 0 : i32
    %c0_i32_0 = arith.constant 0 : i32
    %c0_i32_1 = arith.constant 0 : i32
    %c0_i32_2 = arith.constant 0 : i32
    return %c0_i32, %c0_i32_0, %c0_i32_1 : i32, i32, i32
  }
  func.func @transform_3(%arg0: i32, %arg1: i32) -> (i32, i32) {
    %c0_i32 = arith.constant 0 : i32
    %c0_i32_0 = arith.constant 0 : i32
    %c0_i32_1 = arith.constant 0 : i32
    return %c0_i32, %c0_i32_0 : i32, i32
  }
  func.func @transform_4(%arg0: i32, %arg1: i32) -> (i32, i32) {
    %c0_i32 = arith.constant 0 : i32
    %c0_i32_0 = arith.constant 0 : i32
    %c0_i32_1 = arith.constant 0 : i32
    return %c0_i32, %c0_i32_0 : i32, i32
  }
  func.func @transform_5(%arg0: i32, %arg1: i32) -> (i32, i32) {
    %c0_i32 = arith.constant 0 : i32
    %c0_i32_0 = arith.constant 0 : i32
    %c0_i32_1 = arith.constant 0 : i32
    return %c0_i32, %c0_i32_0 : i32, i32
  }
  func.func @transform_6(%arg0: i32, %arg1: i32) -> (i32, i32, i32) {
    %c0_i32 = arith.constant 0 : i32
    %c0_i32_0 = arith.constant 0 : i32
    %c0_i32_1 = arith.constant 0 : i32
    return %arg0, %c0_i32, %c0_i32_0 : i32, i32, i32
  }
}

</mosaic_0001>

<llo_original>
// kernel: tpu_custom_call.1
$region0: #{tpu_custom_call.1}
  #allocation0 [shape = 'u32[]', space=smem, size = 0x4, offset = 0x4, fixed_abs, tag = 'smem constant byte address 0x4 - core index']
  #allocation1 [shape = 'u32[144,128]{1,0:T(1,128)}', space=vmem, size = 0x12000, scoped, tag = 'internal scratch']
  #allocation2 [shape = 'f32[1,128]{1,0:T(1,128)}', space=vmem, size = 0x200, scoped, tag = 'scratch operand']
  %s0 = inlined_call_operand.vmem [shape: f32[2,328,8], index: 0, kind: input, shape index: {}]
  %s1 = inlined_call_operand.vmem [shape: f32[144,1], index: 1, kind: input, shape index: {}]
  %s2 = inlined_call_operand.vmem [shape: f32[9,8,128], index: 2, kind: input, shape index: {}]
  %s3 = inlined_call_operand.vmem [shape: f32[1,128], index: 3, kind: input, shape index: {}]
  %s4 = inlined_call_operand.vmem [shape: f32[128,128], index: 4, kind: input, shape index: {}]
  %s5 = inlined_call_operand.vmem [shape: f32[1,128], index: 5, kind: input, shape index: {}]
  %s6 = inlined_call_operand.hbm [shape: f32[2,1,128], index: 6, kind: output, shape index: {}]
  %s7 = sld [smem:[#allocation0]]
  $region65: #{tpu_custom_call.1} parent=0
    _
  %s9 = ssub.s32 1, %s7
  %s10 = scalar_select 0, %s9, %s7
  $region1: #{tpu_custom_call.1} parent=0
    #allocation3 [shape = 'u8[1024]{0}', space=vmem, size = 0x400, scoped, tag = 'output window, operand 0']
    #allocation4 [shape = 's32[2]{0}', space=sflag, size = 0x8, scoped, tag = 'scoped memory for tpu_custom_call.1']
    %11 = vsyncpa [#allocation4], 0
    %s12 = scalar_lea.sflag [#allocation4], 1
    %13 = vsyncpa %s12, 0
    loop: start=0, step=1, limit=6
    $region2: #{tpu_custom_call.1} parent=1 // loop_pre_header
      _
    $region3: #{tpu_custom_call.1} parent=1 // loop_header
      %s15 = sphi 0, %s19
      %p16 = scmp.ge.s32.totalorder %s15, 6
      %s22 = sphi 0, %s34
      %s23 = sphi 0, %s30
      %s24 = sphi 0, %s22
      %s25 = sphi 0, %s23
      %s26 = sphi 0, %s24
      %s27 = sphi 0, %s25
      %s37 = sphi 0, %s39
      %s40 = sphi 0, %s37
      %s41 = sphi 0, %s40
      %s57 = sphi 0, %s41
      %s61 = sphi 0, %s61
      %s63 = sphi 0, %s61
      %s64 = sphi 0, %s63
      %s78 = sphi 0, %s64
      %s82 = sphi 0, %s82
      %s84 = sphi 0, %s82
      %s85 = sphi 0, %s84
      %s99 = sphi 0, %s85
      %s103 = sphi 0, %s103
      %s105 = sphi 0, %s103
      %s106 = sphi 0, %s105
      %s120 = sphi 0, %s106
      %s124 = sphi 0, %s124
      %s126 = sphi 0, %s124
      %s127 = sphi 0, %s126
      %s141 = sphi 0, %s127
      %s145 = sphi 0, %s145
      %s147 = sphi 0, %s145
      %s148 = sphi 0, %s147
      %s162 = sphi 0, %s148
      %s168 = sphi 0, %s170
      %s171 = sphi 0, %s168
      %s172 = sphi 0, %s171
      %s188 = sphi 0, %s172
    $region4: #{tpu_custom_call.1} parent=1 // loop_header_branch
      %18 = sbr.rel (%p16) target = $region8
    $region5: #{tpu_custom_call.1} parent=1 // loop_body
      %s20 = ssub.s32 %s15, 1
      %s21 = ssub.s32 %s15, 2
      %s28 = sadd.s32 1, %s23
      %p29 = scmp.ge.s32.totalorder %s28, 2
      %s30 = scalar_select %p29, 0, %s28
      %s31 = sadd.s32 1, %s22
      %s32 = scalar_select %p29, %s31, %s22
      %p33 = scmp.ge.s32.totalorder %s32, 2
      %s34 = scalar_select %p33, 0, %s32
      %s35 = ssub.s32 %s22, %s34
      %p36 = scmp.eq.s32.totalorder %s35, 0
      %s38 = sadd.s32 %s37, 1
      %s39 = scalar_select %p36, %s37, %s38
      %p42 = pneg %p36
      %p43 = scmp.eq.s32.totalorder %s15, 3
      %p44 = por %p42, %p43
      %p45 = scmp.ne.s32.totalorder %s37, %s40
      %p46 = scmp.eq.s32.totalorder %s15, 0
      %p47 = por %p45, %p46
      %p48 = scmp.ne.s32.totalorder %s37, %s40
      %p49 = scmp.eq.s32.totalorder %s20, 3
      %p50 = por %p48, %p49
      %p51 = scmp.ne.s32.totalorder %s40, %s41
      %p52 = scmp.eq.s32.totalorder %s20, 0
      %p53 = por %p51, %p52
      %p54 = scmp.ne.s32.totalorder %s40, %s41
      %p55 = scmp.eq.s32.totalorder %s21, 3
      %p56 = por %p54, %p55
      %p58 = scmp.ne.s32.totalorder %s41, %s57
      %p59 = scmp.eq.s32.totalorder %s21, 0
      %p60 = por %p58, %p59
      %s62 = sadd.s32 %s61, 1
      %p65 = scmp.eq.s32.totalorder %s15, 3
      %p66 = scmp.ne.s32.totalorder %s61, %s63
      %p67 = scmp.eq.s32.totalorder %s15, 0
      %p68 = por %p66, %p67
      %p69 = scmp.ne.s32.totalorder %s61, %s63
      %p70 = scmp.eq.s32.totalorder %s20, 3
      %p71 = por %p69, %p70
      %p72 = scmp.ne.s32.totalorder %s63, %s64
      %p73 = scmp.eq.s32.totalorder %s20, 0
      %p74 = por %p72, %p73
      %p75 = scmp.ne.s32.totalorder %s63, %s64
      %p76 = scmp.eq.s32.totalorder %s21, 3
      %p77 = por %p75, %p76
      %p79 = scmp.ne.s32.totalorder %s64, %s78
      %p80 = scmp.eq.s32.totalorder %s21, 0
      %p81 = por %p79, %p80
      %s83 = sadd.s32 %s82, 1
      %p86 = scmp.eq.s32.totalorder %s15, 3
      %p87 = scmp.ne.s32.totalorder %s82, %s84
      %p88 = scmp.eq.s32.totalorder %s15, 0
      %p89 = por %p87, %p88
      %p90 = scmp.ne.s32.totalorder %s82, %s84
      %p91 = scmp.eq.s32.totalorder %s20, 3
      %p92 = por %p90, %p91
      %p93 = scmp.ne.s32.totalorder %s84, %s85
      %p94 = scmp.eq.s32.totalorder %s20, 0
      %p95 = por %p93, %p94
      %p96 = scmp.ne.s32.totalorder %s84, %s85
      %p97 = scmp.eq.s32.totalorder %s21, 3
      %p98 = por %p96, %p97
      %p100 = scmp.ne.s32.totalorder %s85, %s99
      %p101 = scmp.eq.s32.totalorder %s21, 0
      %p102 = por %p100, %p101
      %s104 = sadd.s32 %s103, 1
      %p107 = scmp.eq.s32.totalorder %s15, 3
      %p108 = scmp.ne.s32.totalorder %s103, %s105
      %p109 = scmp.eq.s32.totalorder %s15, 0
      %p110 = por %p108, %p109
      %p111 = scmp.ne.s32.totalorder %s103, %s105
      %p112 = scmp.eq.s32.totalorder %s20, 3
      %p113 = por %p111, %p112
      %p114 = scmp.ne.s32.totalorder %s105, %s106
      %p115 = scmp.eq.s32.totalorder %s20, 0
      %p116 = por %p114, %p115
      %p117 = scmp.ne.s32.totalorder %s105, %s106
      %p118 = scmp.eq.s32.totalorder %s21, 3
      %p119 = por %p117, %p118
      %p121 = scmp.ne.s32.totalorder %s106, %s120
      %p122 = scmp.eq.s32.totalorder %s21, 0
      %p123 = por %p121, %p122
      %s125 = sadd.s32 %s124, 1
      %p128 = scmp.eq.s32.totalorder %s15, 3
      %p129 = scmp.ne.s32.totalorder %s124, %s126
      %p130 = scmp.eq.s32.totalorder %s15, 0
      %p131 = por %p129, %p130
      %p132 = scmp.ne.s32.totalorder %s124, %s126
      %p133 = scmp.eq.s32.totalorder %s20, 3
      %p134 = por %p132, %p133
      %p135 = scmp.ne.s32.totalorder %s126, %s127
      %p136 = scmp.eq.s32.totalorder %s20, 0
      %p137 = por %p135, %p136
      %p138 = scmp.ne.s32.totalorder %s126, %s127
      %p139 = scmp.eq.s32.totalorder %s21, 3
      %p140 = por %p138, %p139
      %p142 = scmp.ne.s32.totalorder %s127, %s141
      %p143 = scmp.eq.s32.totalorder %s21, 0
      %p144 = por %p142, %p143
      %s146 = sadd.s32 %s145, 1
      %p149 = scmp.eq.s32.totalorder %s15, 3
      %p150 = scmp.ne.s32.totalorder %s145, %s147
      %p151 = scmp.eq.s32.totalorder %s15, 0
      %p152 = por %p150, %p151
      %p153 = scmp.ne.s32.totalorder %s145, %s147
      %p154 = scmp.eq.s32.totalorder %s20, 3
      %p155 = por %p153, %p154
      %p156 = scmp.ne.s32.totalorder %s147, %s148
      %p157 = scmp.eq.s32.totalorder %s20, 0
      %p158 = por %p156, %p157
      %p159 = scmp.ne.s32.totalorder %s147, %s148
      %p160 = scmp.eq.s32.totalorder %s21, 3
      %p161 = por %p159, %p160
      %p163 = scmp.ne.s32.totalorder %s148, %s162
      %p164 = scmp.eq.s32.totalorder %s21, 0
      %p165 = por %p163, %p164
      %s166 = ssub.s32 %s22, %s34
      %p167 = scmp.eq.s32.totalorder %s166, 0
      %s169 = sadd.s32 %s168, 1
      %s170 = scalar_select %p167, %s168, %s169
      %p173 = pneg %p167
      %p174 = scmp.eq.s32.totalorder %s15, 3
      %p175 = por %p173, %p174
      %p176 = scmp.ne.s32.totalorder %s168, %s171
      %p177 = scmp.eq.s32.totalorder %s15, 0
      %p178 = por %p176, %p177
      %p179 = scmp.ne.s32.totalorder %s168, %s171
      %p180 = scmp.eq.s32.totalorder %s20, 3
      %p181 = por %p179, %p180
      %p182 = scmp.ne.s32.totalorder %s171, %s172
      %p183 = scmp.eq.s32.totalorder %s20, 0
      %p184 = por %p182, %p183
      %p185 = scmp.ne.s32.totalorder %s171, %s172
      %p186 = scmp.eq.s32.totalorder %s21, 3
      %p187 = por %p185, %p186
      %p189 = scmp.ne.s32.totalorder %s172, %s188
      %p190 = scmp.eq.s32.totalorder %s21, 0
      %p191 = por %p189, %p190
      %p192 = scmp.le.s32.totalorder 1, %s15
      %p193 = scmp.lt.s32.totalorder %s15, 5
      %p194 = pnand %p192, %p193
      %p195 = pneg %p194
      // Predicated region
      $region9: #{tpu_custom_call.1} parent=5 // pred_check
        _
      $region10: #{tpu_custom_call.1} parent=5 // pred_check_branch
        %197 = sbr.rel (%p194) target = $region12
      $region11: #{tpu_custom_call.1} parent=5 // pred_region
        %s198 = ssub.s32 %s15, 1
        // Predicated region
        $region13: #{tpu_custom_call.1} parent=11 // pred_check
          %p199 = pneg %p74
        $region14: #{tpu_custom_call.1} parent=11 // pred_check_branch
          %201 = sbr.rel (%p199) target = $region16
        $region15: #{tpu_custom_call.1} parent=11 // pred_region
          _
        $region16: #{tpu_custom_call.1} parent=11 // pred_fallthru
          _
        // Predicated region
        $region17: #{tpu_custom_call.1} parent=11 // pred_check
          %p202 = pneg %p95
        $region18: #{tpu_custom_call.1} parent=11 // pred_check_branch
          %204 = sbr.rel (%p202) target = $region20
        $region19: #{tpu_custom_call.1} parent=11 // pred_region
          _
        $region20: #{tpu_custom_call.1} parent=11 // pred_fallthru
          _
        // Predicated region
        $region21: #{tpu_custom_call.1} parent=11 // pred_check
          %p205 = pneg %p116
        $region22: #{tpu_custom_call.1} parent=11 // pred_check_branch
          %207 = sbr.rel (%p205) target = $region24
        $region23: #{tpu_custom_call.1} parent=11 // pred_region
          _
        $region24: #{tpu_custom_call.1} parent=11 // pred_fallthru
          _
        // Predicated region
        $region25: #{tpu_custom_call.1} parent=11 // pred_check
          %p208 = pneg %p137
        $region26: #{tpu_custom_call.1} parent=11 // pred_check_branch
          %210 = sbr.rel (%p208) target = $region28
        $region27: #{tpu_custom_call.1} parent=11 // pred_region
          _
        $region28: #{tpu_custom_call.1} parent=11 // pred_fallthru
          _
        // Predicated region
        $region29: #{tpu_custom_call.1} parent=11 // pred_check
          %p211 = pneg %p158
        $region30: #{tpu_custom_call.1} parent=11 // pred_check_branch
          %213 = sbr.rel (%p211) target = $region32
        $region31: #{tpu_custom_call.1} parent=11 // pred_region
          _
        $region32: #{tpu_custom_call.1} parent=11 // pred_fallthru
          _
      $region12: #{tpu_custom_call.1} parent=5 // pred_fallthru
        _
      %p214 = scmp.lt.s32.totalorder %s15, 4
      // Predicated region
      $region33: #{tpu_custom_call.1} parent=5 // pred_check
        %p215 = pneg %p214
      $region34: #{tpu_custom_call.1} parent=5 // pred_check_branch
        %217 = sbr.rel (%p215) target = $region36
      $region35: #{tpu_custom_call.1} parent=5 // pred_region
        // Predicated region
        $region37: #{tpu_custom_call.1} parent=35 // pred_check
          %p218 = pneg %p47
        $region38: #{tpu_custom_call.1} parent=35 // pred_check_branch
          %220 = sbr.rel (%p218) target = $region40
        $region39: #{tpu_custom_call.1} parent=35 // pred_region
          %p221 = scmp.lt.s32.totalorder %s22, 1
          %s222 = scalar_select %p221, %s22, 1
          %s223 = smul.addr %s222, 41
          %s224 = smul.addr %s223, 8
          %s225 = scalar_lea.vmem %s0, %s224
        $region40: #{tpu_custom_call.1} parent=35 // pred_fallthru
          _
      $region36: #{tpu_custom_call.1} parent=5 // pred_fallthru
        _
      %p226 = scmp.le.s32.totalorder 1, %s15
      %p227 = scmp.lt.s32.totalorder %s15, 5
      %p228 = pnand %p226, %p227
      %p229 = pneg %p228
      // Predicated region
      $region41: #{tpu_custom_call.1} parent=5 // pred_check
        _
      $region42: #{tpu_custom_call.1} parent=5 // pred_check_branch
        %231 = sbr.rel (%p228) target = $region44
      $region43: #{tpu_custom_call.1} parent=5 // pred_region
        %s232 = ssub.s32 %s15, 1
        %p233 = scmp.lt.s32.totalorder %s24, 1
        %s234 = scalar_select %p233, %s24, 1
        %s235 = smul.addr %s234, 41
        %s236 = smul.addr %s235, 8
        %s237 = scalar_lea.vmem %s0, %s236
        %p238 = pneg %p53
        %p239 = pneg %p50
        %p240 = pneg %p74
        %p241 = pneg %p71
        %p242 = pneg %p95
        %p243 = pneg %p92
        %p244 = pneg %p116
        %p245 = pneg %p113
        %p246 = pneg %p137
        %p247 = pneg %p134
        %p248 = pneg %p158
        %p249 = pneg %p155
        %p250 = pneg %p184
        %p251 = pneg %p181
        %s252 = sand.u32 %s171, 1
        %s253 = scalar_lea.sflag [#allocation4], %s252
        %s254 = sand.u32 %s171, 1
        %s255 = scalar_lea.vmem [#allocation3], %s254
        %p256 = scmp.lt.s32.totalorder %s24, 1
        %s257 = scalar_select %p256, %s24, 1
        %s258 = smul.addr %s257, 41
        %s259 = smul.addr %s258, 8
        %s260 = scalar_lea.vmem %s0, %s259
        %p261 = scmp.eq.s32.totalorder %s25, 0
        // Predicated region
        $region45: #{tpu_custom_call.1} parent=43 // pred_check
          %p262 = pneg %p261
        $region46: #{tpu_custom_call.1} parent=43 // pred_check_branch
          %264 = sbr.rel (%p262) target = $region48
        $region47: #{tpu_custom_call.1} parent=43 // pred_region
          %265 = vst [vmem:[#allocation2] sm:$0x1] 0.0
        $region48: #{tpu_custom_call.1} parent=43 // pred_fallthru
          _
        %s266 = smul.u32 %s25, 8
        %s267 = smul.u32 %s25, 144
        %s268 = scalar_lea.vmem %s260, %s267
        %v269 = vld [vmem:[%s268] sm:$0xff]
        %v270 = vld [vmem:[%s268 + $0x8] sm:$0xff]
        %v271 = vld [vmem:[%s268 + $0x10] sm:$0xff]
        %v272 = vld [vmem:[%s268 + $0x18] sm:$0xff]
        %v273 = vld [vmem:[%s268 + $0x20] sm:$0xff]
        %v274 = vld [vmem:[%s268 + $0x28] sm:$0xff]
        %v275 = vld [vmem:[%s268 + $0x30] sm:$0xff]
        %v276 = vld [vmem:[%s268 + $0x38] sm:$0xff]
        %v277 = vld [vmem:[%s268 + $0x40] sm:$0xff]
        %v278 = vld [vmem:[%s268 + $0x48] sm:$0xff]
        %v279 = vld [vmem:[%s268 + $0x50] sm:$0xff]
        %v280 = vld [vmem:[%s268 + $0x58] sm:$0xff]
        %v281 = vld [vmem:[%s268 + $0x60] sm:$0xff]
        %v282 = vld [vmem:[%s268 + $0x68] sm:$0xff]
        %v283 = vld [vmem:[%s268 + $0x70] sm:$0xff]
        %v284 = vld [vmem:[%s268 + $0x78] sm:$0xff]
        %v285 = vld [vmem:[%s268 + $0x80] sm:$0xff]
        %v286 = vld [vmem:[%s268 + $0x88] sm:$0xff]
        %v287 = vld [vmem:[%s2] sm:$0xff]
        %s288 = sadd.s32 %s267, 1
        %s289 = scalar_lea.vmem %s260, %s288
        %v290 = vld [vmem:[%s289] sm:$0xff]
        %v291 = vld [vmem:[%s289 + $0x8] sm:$0xff]
        %v292 = vld [vmem:[%s289 + $0x10] sm:$0xff]
        %v293 = vld [vmem:[%s289 + $0x18] sm:$0xff]
        %v294 = vld [vmem:[%s289 + $0x20] sm:$0xff]
        %v295 = vld [vmem:[%s289 + $0x28] sm:$0xff]
        %v296 = vld [vmem:[%s289 + $0x30] sm:$0xff]
        %v297 = vld [vmem:[%s289 + $0x38] sm:$0xff]
        %v298 = vld [vmem:[%s289 + $0x40] sm:$0xff]
        %v299 = vld [vmem:[%s289 + $0x48] sm:$0xff]
        %v300 = vld [vmem:[%s289 + $0x50] sm:$0xff]
        %v301 = vld [vmem:[%s289 + $0x58] sm:$0xff]
        %v302 = vld [vmem:[%s289 + $0x60] sm:$0xff]
        %v303 = vld [vmem:[%s289 + $0x68] sm:$0xff]
        %v304 = vld [vmem:[%s289 + $0x70] sm:$0xff]
        %v305 = vld [vmem:[%s289 + $0x78] sm:$0xff]
        %v306 = vld [vmem:[%s289 + $0x80] sm:$0xff]
        %v307 = vld [vmem:[%s289 + $0x88] sm:$0xff]
        %s308 = scalar_lea.vmem %s2, 8
        %v309 = vld [vmem:[%s308] sm:$0xff]
        %vm310 = vcmask 64512
        %v312 = vsel %vm310, %v290, 0
        %v315 = vsel %vm310, %v291, 0
        %v318 = vsel %vm310, %v292, 0
        %v321 = vsel %vm310, %v293, 0
        %v324 = vsel %vm310, %v294, 0
        %v327 = vsel %vm310, %v295, 0
        %v330 = vsel %vm310, %v296, 0
        %v333 = vsel %vm310, %v297, 0
        %v336 = vsel %vm310, %v298, 0
        %v339 = vsel %vm310, %v299, 0
        %v342 = vsel %vm310, %v300, 0
        %v345 = vsel %vm310, %v301, 0
        %v348 = vsel %vm310, %v302, 0
        %v351 = vsel %vm310, %v303, 0
        %v354 = vsel %vm310, %v304, 0
        %v357 = vsel %vm310, %v305, 0
        %v360 = vsel %vm310, %v306, 0
        %v363 = vsel %vm310, %v307, 0
        %365 = vmatprep.subr.mxu0 0.0
        %366 = vmatpush1.msra.mxu0 %v309
        %367 = vmatprep.subr.mxu0 0.0
        %368 = vmatpush1.msra.mxu0 0.0
        %369 = vmatprep.subr.mxu0 0.0
        %370 = vmatpush1.msra.mxu0 0.0
        %371 = vmatprep.subr.mxu0 0.0
        %372 = vmatpush1.msra.mxu0 0.0
        %373 = vmatprep.subr.mxu0 0.0
        %374 = vmatpush1.msra.mxu0 0.0
        %375 = vmatprep.subr.mxu0 0.0
        %376 = vmatpush1.msra.mxu0 0.0
        %377 = vmatprep.subr.mxu0 0.0
        %378 = vmatpush1.msra.mxu0 0.0
        %379 = vmatprep.subr.mxu0 0.0
        %380 = vmatpush1.msra.mxu0 0.0
        %381 = vmatprep.subr.mxu0 0.0
        %382 = vmatpush1.msra.mxu0 0.0
        %383 = vmatprep.subr.mxu0 0.0
        %384 = vmatpush1.msra.mxu0 0.0
        %385 = vmatprep.subr.mxu0 0.0
        %386 = vmatpush1.msra.mxu0 0.0
        %387 = vmatprep.subr.mxu0 0.0
        %388 = vmatpush1.msra.mxu0 0.0
        %389 = vmatprep.subr.mxu0 0.0
        %390 = vmatpush1.msra.mxu0 0.0
        %391 = vmatprep.subr.mxu0 0.0
        %392 = vmatpush1.msra.mxu0 0.0
        %393 = vmatprep.subr.mxu0 0.0
        %394 = vmatpush1.msra.mxu0 0.0
        %395 = vmatprep.subr.mxu0 0.0
        %396 = vmatpush1.msra.mxu0 0.0
        %397 = vmatprep.subr.mxu0 0.0
        %398 = vmatpush1.msra.mxu0 0.0
        %399 = vmatprep.subr.mxu0 0.0
        %400 = vmatpush1.msra.mxu0 0.0
        %401 = vmatprep.subr.mxu0 0.0
        %402 = vmatpush1.msra.mxu0 0.0
        %403 = vmatprep.subr.mxu0 0.0
        %404 = vmatpush1.msra.mxu0 0.0
        %405 = vmatprep.subr.mxu0 0.0
        %406 = vmatpush1.msra.mxu0 0.0
        %407 = vmatprep.subr.mxu0 0.0
        %408 = vmatpush1.msra.mxu0 0.0
        %409 = vmatprep.subr.mxu0 0.0
        %410 = vmatpush1.msra.mxu0 0.0
        %411 = vmatprep.subr.mxu0 0.0
        %412 = vmatpush1.msra.mxu0 0.0
        %413 = vmatprep.subr.mxu0 0.0
        %414 = vmatpush1.msra.mxu0 0.0
        %415 = vmatprep.subr.mxu0 0.0
        %416 = vmatpush1.msra.mxu0 0.0
        %417 = vmatprep.subr.mxu0 0.0
        %418 = vmatpush1.msra.mxu0 0.0
        %419 = vmatprep.subr.mxu0 0.0
        %420 = vmatpush1.msra.mxu0 0.0
        %421 = vmatprep.subr.mxu0 0.0
        %422 = vmatpush1.msra.mxu0 0.0
        %423 = vmatprep.subr.mxu0 0.0
        %424 = vmatpush1.msra.mxu0 0.0
        %425 = vmatprep.subr.mxu0 0.0
        %426 = vmatpush1.msra.mxu0 0.0
        %427 = vmatprep.subr.mxu0 0.0
        %428 = vmatpush1.msra.mxu0 0.0
        %429 = vmatprep.mubr.f32.mxu0 0.0
        %430 = vmatmul.mubr.f32.gmra.mrb[0].mxu0 %v312
        %v431 = vpop.f32.mrb[0].mxu0
        %v432 = vadd.f32 0.0, %v431
        %v433 = vpop.f32.mrb[0].mxu0
        %434 = vmatprep.mubr.f32.mxu0 0.0
        %435 = vmatmul.mubr.f32.gmra.mrb[0].mxu0 %v315
        %v436 = vpop.f32.mrb[0].mxu0
        %v437 = vadd.f32 0.0, %v436
        %v438 = vpop.f32.mrb[0].mxu0
        %439 = vmatprep.mubr.f32.mxu0 0.0
        %440 = vmatmul.mubr.f32.gmra.mrb[0].mxu0 %v318
        %v441 = vpop.f32.mrb[0].mxu0
        %v442 = vadd.f32 0.0, %v441
        %v443 = vpop.f32.mrb[0].mxu0
        %444 = vmatprep.mubr.f32.mxu0 0.0
        %445 = vmatmul.mubr.f32.gmra.mrb[0].mxu0 %v321
        %v446 = vpop.f32.mrb[0].mxu0
        %v447 = vadd.f32 0.0, %v446
        %v448 = vpop.f32.mrb[0].mxu0
        %449 = vmatprep.mubr.f32.mxu0 0.0
        %450 = vmatmul.mubr.f32.gmra.mrb[0].mxu0 %v324
        %v451 = vpop.f32.mrb[0].mxu0
        %v452 = vadd.f32 0.0, %v451
        %v453 = vpop.f32.mrb[0].mxu0
        %454 = vmatprep.mubr.f32.mxu0 0.0
        %455 = vmatmul.mubr.f32.gmra.mrb[0].mxu0 %v327
        %v456 = vpop.f32.mrb[0].mxu0
        %v457 = vadd.f32 0.0, %v456
        %v458 = vpop.f32.mrb[0].mxu0
        %459 = vmatprep.mubr.f32.mxu0 0.0
        %460 = vmatmul.mubr.f32.gmra.mrb[0].mxu0 %v330
        %v461 = vpop.f32.mrb[0].mxu0
        %v462 = vadd.f32 0.0, %v461
        %v463 = vpop.f32.mrb[0].mxu0
        %464 = vmatprep.mubr.f32.mxu0 0.0
        %465 = vmatmul.mubr.f32.gmra.mrb[0].mxu0 %v333
        %v466 = vpop.f32.mrb[0].mxu0
        %v467 = vadd.f32 0.0, %v466
        %v468 = vpop.f32.mrb[0].mxu0
        %469 = vmatprep.mubr.f32.mxu0 0.0
        %470 = vmatmul.mubr.f32.gmra.mrb[0].mxu0 %v336
        %v471 = vpop.f32.mrb[0].mxu0
        %v472 = vadd.f32 0.0, %v471
        %v473 = vpop.f32.mrb[0].mxu0
        %474 = vmatprep.mubr.f32.mxu0 0.0
        %475 = vmatmul.mubr.f32.gmra.mrb[0].mxu0 %v339
        %v476 = vpop.f32.mrb[0].mxu0
        %v477 = vadd.f32 0.0, %v476
        %v478 = vpop.f32.mrb[0].mxu0
        %479 = vmatprep.mubr.f32.mxu0 0.0
        %480 = vmatmul.mubr.f32.gmra.mrb[0].mxu0 %v342
        %v481 = vpop.f32.mrb[0].mxu0
        %v482 = vadd.f32 0.0, %v481
        %v483 = vpop.f32.mrb[0].mxu0
        %484 = vmatprep.mubr.f32.mxu0 0.0
        %485 = vmatmul.mubr.f32.gmra.mrb[0].mxu0 %v345
        %v486 = vpop.f32.mrb[0].mxu0
        %v487 = vadd.f32 0.0, %v486
        %v488 = vpop.f32.mrb[0].mxu0
        %489 = vmatprep.mubr.f32.mxu0 0.0
        %490 = vmatmul.mubr.f32.gmra.mrb[0].mxu0 %v348
        %v491 = vpop.f32.mrb[0].mxu0
        %v492 = vadd.f32 0.0, %v491
        %v493 = vpop.f32.mrb[0].mxu0
        %494 = vmatprep.mubr.f32.mxu0 0.0
        %495 = vmatmul.mubr.f32.gmra.mrb[0].mxu0 %v351
        %v496 = vpop.f32.mrb[0].mxu0
        %v497 = vadd.f32 0.0, %v496
        %v498 = vpop.f32.mrb[0].mxu0
        %499 = vmatprep.mubr.f32.mxu0 0.0
        %500 = vmatmul.mubr.f32.gmra.mrb[0].mxu0 %v354
        %v501 = vpop.f32.mrb[0].mxu0
        %v502 = vadd.f32 0.0, %v501
        %v503 = vpop.f32.mrb[0].mxu0
        %504 = vmatprep.mubr.f32.mxu0 0.0
        %505 = vmatmul.mubr.f32.gmra.mrb[0].mxu0 %v357
        %v506 = vpop.f32.mrb[0].mxu0
        %v507 = vadd.f32 0.0, %v506
        %v508 = vpop.f32.mrb[0].mxu0
        %509 = vmatprep.mubr.f32.mxu0 0.0
        %510 = vmatmul.mubr.f32.gmra.mrb[0].mxu0 %v360
        %v511 = vpop.f32.mrb[0].mxu0
        %v512 = vadd.f32 0.0, %v511
        %v513 = vpop.f32.mrb[0].mxu0
        %514 = vmatprep.mubr.f32.mxu0 0.0
        %515 = vmatmul.mubr.f32.gmra.mrb[0].mxu0 %v363
        %v516 = vpop.f32.mrb[0].mxu0
        %v517 = vadd.f32 0.0, %v516
        %v518 = vpop.f32.mrb[0].mxu0
        %519 = vdwg.mxu0
        %v521 = vsel %vm310, %v269, 0
        %v524 = vsel %vm310, %v270, 0
        %v527 = vsel %vm310, %v271, 0
        %v530 = vsel %vm310, %v272, 0
        %v533 = vsel %vm310, %v273, 0
        %v536 = vsel %vm310, %v274, 0
        %v539 = vsel %vm310, %v275, 0
        %v542 = vsel %vm310, %v276, 0
        %v545 = vsel %vm310, %v277, 0
        %v548 = vsel %vm310, %v278, 0
        %v551 = vsel %vm310, %v279, 0
        %v554 = vsel %vm310, %v280, 0
        %v557 = vsel %vm310, %v281, 0
        %v560 = vsel %vm310, %v282, 0
        %v563 = vsel %vm310, %v283, 0
        %v566 = vsel %vm310, %v284, 0
        %v569 = vsel %vm310, %v285, 0
        %v572 = vsel %vm310, %v286, 0
        %574 = vmatprep.subr.mxu0 0.0
        %575 = vmatpush1.msra.mxu0 %v287
        %576 = vmatprep.subr.mxu0 0.0
        %577 = vmatpush1.msra.mxu0 0.0
        %578 = vmatprep.subr.mxu0 0.0
        %579 = vmatpush1.msra.mxu0 0.0
        %580 = vmatprep.subr.mxu0 0.0
        %581 = vmatpush1.msra.mxu0 0.0
        %582 = vmatprep.subr.mxu0 0.0
        %583 = vmatpush1.msra.mxu0 0.0
        %584 = vmatprep.subr.mxu0 0.0
        %585 = vmatpush1.msra.mxu0 0.0
        %586 = vmatprep.subr.mxu0 0.0
        %587 = vmatpush1.msra.mxu0 0.0
        %588 = vmatprep.subr.mxu0 0.0
        %589 = vmatpush1.msra.mxu0 0.0
        %590 = vmatprep.subr.mxu0 0.0
        %591 = vmatpush1.msra.mxu0 0.0
        %592 = vmatprep.subr.mxu0 0.0
        %593 = vmatpush1.msra.mxu0 0.0
        %594 = vmatprep.subr.mxu0 0.0
        %595 = vmatpush1.msra.mxu0 0.0
        %596 = vmatprep.subr.mxu0 0.0
        %597 = vmatpush1.msra.mxu0 0.0
        %598 = vmatprep.subr.mxu0 0.0
        %599 = vmatpush1.msra.mxu0 0.0
        %600 = vmatprep.subr.mxu0 0.0
        %601 = vmatpush1.msra.mxu0 0.0
        %602 = vmatprep.subr.mxu0 0.0
        %603 = vmatpush1.msra.mxu0 0.0
        %604 = vmatprep.subr.mxu0 0.0
        %605 = vmatpush1.msra.mxu0 0.0
        %606 = vmatprep.subr.mxu0 0.0
        %607 = vmatpush1.msra.mxu0 0.0
        %608 = vmatprep.subr.mxu0 0.0
        %609 = vmatpush1.msra.mxu0 0.0
        %610 = vmatprep.subr.mxu0 0.0
        %611 = vmatpush1.msra.mxu0 0.0
        %612 = vmatprep.subr.mxu0 0.0
        %613 = vmatpush1.msra.mxu0 0.0
        %614 = vmatprep.subr.mxu0 0.0
        %615 = vmatpush1.msra.mxu0 0.0
        %616 = vmatprep.subr.mxu0 0.0
        %617 = vmatpush1.msra.mxu0 0.0
        %618 = vmatprep.subr.mxu0 0.0
        %619 = vmatpush1.msra.mxu0 0.0
        %620 = vmatprep.subr.mxu0 0.0
        %621 = vmatpush1.msra.mxu0 0.0
        %622 = vmatprep.subr.mxu0 0.0
        %623 = vmatpush1.msra.mxu0 0.0
        %624 = vmatprep.subr.mxu0 0.0
        %625 = vmatpush1.msra.mxu0 0.0
        %626 = vmatprep.subr.mxu0 0.0
        %627 = vmatpush1.msra.mxu0 0.0
        %628 = vmatprep.subr.mxu0 0.0
        %629 = vmatpush1.msra.mxu0 0.0
        %630 = vmatprep.subr.mxu0 0.0
        %631 = vmatpush1.msra.mxu0 0.0
        %632 = vmatprep.subr.mxu0 0.0
        %633 = vmatpush1.msra.mxu0 0.0
        %634 = vmatprep.subr.mxu0 0.0
        %635 = vmatpush1.msra.mxu0 0.0
        %636 = vmatprep.subr.mxu0 0.0
        %637 = vmatpush1.msra.mxu0 0.0
        %638 = vmatprep.mubr.f32.mxu0 0.0
        %639 = vmatmul.mubr.f32.gmra.mrb[0].mxu0 %v521
        %v640 = vpop.f32.mrb[0].mxu0
        %v641 = vadd.f32 %v432, %v640
        %v642 = vpop.f32.mrb[0].mxu0
        %643 = vmatprep.mubr.f32.mxu0 0.0
        %644 = vmatmul.mubr.f32.gmra.mrb[0].mxu0 %v524
        %v645 = vpop.f32.mrb[0].mxu0
        %v646 = vadd.f32 %v437, %v645
        %v647 = vpop.f32.mrb[0].mxu0
        %648 = vmatprep.mubr.f32.mxu0 0.0
        %649 = vmatmul.mubr.f32.gmra.mrb[0].mxu0 %v527
        %v650 = vpop.f32.mrb[0].mxu0
        %v651 = vadd.f32 %v442, %v650
        %v652 = vpop.f32.mrb[0].mxu0
        %653 = vmatprep.mubr.f32.mxu0 0.0
        %654 = vmatmul.mubr.f32.gmra.mrb[0].mxu0 %v530
        %v655 = vpop.f32.mrb[0].mxu0
        %v656 = vadd.f32 %v447, %v655
        %v657 = vpop.f32.mrb[0].mxu0
        %658 = vmatprep.mubr.f32.mxu0 0.0
        %659 = vmatmul.mubr.f32.gmra.mrb[0].mxu0 %v533
        %v660 = vpop.f32.mrb[0].mxu0
        %v661 = vadd.f32 %v452, %v660
        %v662 = vpop.f32.mrb[0].mxu0
        %663 = vmatprep.mubr.f32.mxu0 0.0
        %664 = vmatmul.mubr.f32.gmra.mrb[0].mxu0 %v536
        %v665 = vpop.f32.mrb[0].mxu0
        %v666 = vadd.f32 %v457, %v665
        %v667 = vpop.f32.mrb[0].mxu0
        %668 = vmatprep.mubr.f32.mxu0 0.0
        %669 = vmatmul.mubr.f32.gmra.mrb[0].mxu0 %v539
        %v670 = vpop.f32.mrb[0].mxu0
        %v671 = vadd.f32 %v462, %v670
        %v672 = vpop.f32.mrb[0].mxu0
        %673 = vmatprep.mubr.f32.mxu0 0.0
        %674 = vmatmul.mubr.f32.gmra.mrb[0].mxu0 %v542
        %v675 = vpop.f32.mrb[0].mxu0
        %v676 = vadd.f32 %v467, %v675
        %v677 = vpop.f32.mrb[0].mxu0
        %678 = vmatprep.mubr.f32.mxu0 0.0
        %679 = vmatmul.mubr.f32.gmra.mrb[0].mxu0 %v545
        %v680 = vpop.f32.mrb[0].mxu0
        %v681 = vadd.f32 %v472, %v680
        %v682 = vpop.f32.mrb[0].mxu0
        %683 = vmatprep.mubr.f32.mxu0 0.0
        %684 = vmatmul.mubr.f32.gmra.mrb[0].mxu0 %v548
        %v685 = vpop.f32.mrb[0].mxu0
        %v686 = vadd.f32 %v477, %v685
        %v687 = vpop.f32.mrb[0].mxu0
        %688 = vmatprep.mubr.f32.mxu0 0.0
        %689 = vmatmul.mubr.f32.gmra.mrb[0].mxu0 %v551
        %v690 = vpop.f32.mrb[0].mxu0
        %v691 = vadd.f32 %v482, %v690
        %v692 = vpop.f32.mrb[0].mxu0
        %693 = vmatprep.mubr.f32.mxu0 0.0
        %694 = vmatmul.mubr.f32.gmra.mrb[0].mxu0 %v554
        %v695 = vpop.f32.mrb[0].mxu0
        %v696 = vadd.f32 %v487, %v695
        %v697 = vpop.f32.mrb[0].mxu0
        %698 = vmatprep.mubr.f32.mxu0 0.0
        %699 = vmatmul.mubr.f32.gmra.mrb[0].mxu0 %v557
        %v700 = vpop.f32.mrb[0].mxu0
        %v701 = vadd.f32 %v492, %v700
        %v702 = vpop.f32.mrb[0].mxu0
        %703 = vmatprep.mubr.f32.mxu0 0.0
        %704 = vmatmul.mubr.f32.gmra.mrb[0].mxu0 %v560
        %v705 = vpop.f32.mrb[0].mxu0
        %v706 = vadd.f32 %v497, %v705
        %v707 = vpop.f32.mrb[0].mxu0
        %708 = vmatprep.mubr.f32.mxu0 0.0
        %709 = vmatmul.mubr.f32.gmra.mrb[0].mxu0 %v563
        %v710 = vpop.f32.mrb[0].mxu0
        %v711 = vadd.f32 %v502, %v710
        %v712 = vpop.f32.mrb[0].mxu0
        %713 = vmatprep.mubr.f32.mxu0 0.0
        %714 = vmatmul.mubr.f32.gmra.mrb[0].mxu0 %v566
        %v715 = vpop.f32.mrb[0].mxu0
        %v716 = vadd.f32 %v507, %v715
        %v717 = vpop.f32.mrb[0].mxu0
        %718 = vmatprep.mubr.f32.mxu0 0.0
        %719 = vmatmul.mubr.f32.gmra.mrb[0].mxu0 %v569
        %v720 = vpop.f32.mrb[0].mxu0
        %v721 = vadd.f32 %v512, %v720
        %v722 = vpop.f32.mrb[0].mxu0
        %723 = vmatprep.mubr.f32.mxu0 0.0
        %724 = vmatmul.mubr.f32.gmra.mrb[0].mxu0 %v572
        %v725 = vpop.f32.mrb[0].mxu0
        %v726 = vadd.f32 %v517, %v725
        %v727 = vpop.f32.mrb[0].mxu0
        %728 = vdwg.mxu0
        %s729 = sadd.s32 %s267, 2
        %s730 = scalar_lea.vmem %s260, %s729
        %v731 = vld [vmem:[%s730] sm:$0xff]
        %v732 = vld [vmem:[%s730 + $0x8] sm:$0xff]
        %v733 = vld [vmem:[%s730 + $0x10] sm:$0xff]
        %v734 = vld [vmem:[%s730 + $0x18] sm:$0xff]
        %v735 = vld [vmem:[%s730 + $0x20] sm:$0xff]
        %v736 = vld [vmem:[%s730 + $0x28] sm:$0xff]
        %v737 = vld [vmem:[%s730 + $0x30] sm:$0xff]
        %v738 = vld [vmem:[%s730 + $0x38] sm:$0xff]
        %v739 = vld [vmem:[%s730 + $0x40] sm:$0xff]
        %v740 = vld [vmem:[%s730 + $0x48] sm:$0xff]
        %v741 = vld [vmem:[%s730 + $0x50] sm:$0xff]
        %v742 = vld [vmem:[%s730 + $0x58] sm:$0xff]
        %v743 = vld [vmem:[%s730 + $0x60] sm:$0xff]
        %v744 = vld [vmem:[%s730 + $0x68] sm:$0xff]
        %v745 = vld [vmem:[%s730 + $0x70] sm:$0xff]
        %v746 = vld [vmem:[%s730 + $0x78] sm:$0xff]
        %v747 = vld [vmem:[%s730 + $0x80] sm:$0xff]
        %v748 = vld [vmem:[%s730 + $0x88] sm:$0xff]
        %s749 = scalar_lea.vmem %s2, 16
        %v750 = vld [vmem:[%s749] sm:$0xff]
        %v752 = vsel %vm310, %v731, 0
        %v755 = vsel %vm310, %v732, 0
        %v758 = vsel %vm310, %v733, 0
        %v761 = vsel %vm310, %v734, 0
        %v764 = vsel %vm310, %v735, 0
        %v767 = vsel %vm310, %v736, 0
        %v770 = vsel %vm310, %v737, 0
        %v773 = vsel %vm310, %v738, 0
        %v776 = vsel %vm310, %v739, 0
        %v779 = vsel %vm310, %v740, 0
        %v782 = vsel %vm310, %v741, 0
        %v785 = vsel %vm310, %v742, 0
        %v788 = vsel %vm310, %v743, 0
        %v791 = vsel %vm310, %v744, 0
        %v794 = vsel %vm310, %v745, 0
        %v797 = vsel %vm310, %v746, 0
        %v800 = vsel %vm310, %v747, 0
        %v803 = vsel %vm310, %v748, 0
        %805 = vmatprep.subr.mxu0 0.0
        %806 = vmatpush1.msra.mxu0 %v750
        %807 = vmatprep.subr.mxu0 0.0
        %808 = vmatpush1.msra.mxu0 0.0
        %809 = vmatprep.subr.mxu0 0.0
        %810 = vmatpush1.msra.mxu0 0.0
        %811 = vmatprep.subr.mxu0 0.0
        %812 = vmatpush1.msra.mxu0 0.0
        %813 = vmatprep.subr.mxu0 0.0
        %814 = vmatpush1.msra.mxu0 0.0
        %815 = vmatprep.subr.mxu0 0.0
        %816 = vmatpush1.msra.mxu0 0.0
        %817 = vmatprep.subr.mxu0 0.0
        %818 = vmatpush1.msra.mxu0 0.0
        %819 = vmatprep.subr.mxu0 0.0
        %820 = vmatpush1.msra.mxu0 0.0
        %821 = vmatprep.subr.mxu0 0.0
        %822 = vmatpush1.msra.mxu0 0.0
        %823 = vmatprep.subr.mxu0 0.0
        %824 = vmatpush1.msra.mxu0 0.0
        %825 = vmatprep.subr.mxu0 0.0
        %826 = vmatpush1.msra.mxu0 0.0
        %827 = vmatprep.subr.mxu0 0.0
        %828 = vmatpush1.msra.mxu0 0.0
        %829 = vmatprep.subr.mxu0 0.0
        %830 = vmatpush1.msra.mxu0 0.0
        %831 = vmatprep.subr.mxu0 0.0
        %832 = vmatpush1.msra.mxu0 0.0
        %833 = vmatprep.subr.mxu0 0.0
        %834 = vmatpush1.msra.mxu0 0.0
        %835 = vmatprep.subr.mxu0 0.0
        %836 = vmatpush1.msra.mxu0 0.0
        %837 = vmatprep.subr.mxu0 0.0
        %838 = vmatpush1.msra.mxu0 0.0
        %839 = vmatprep.subr.mxu0 0.0
        %840 = vmatpush1.msra.mxu0 0.0
        %841 = vmatprep.subr.mxu0 0.0
        %842 = vmatpush1.msra.mxu0 0.0
        %843 = vmatprep.subr.mxu0 0.0
        %844 = vmatpush1.msra.mxu0 0.0
        %845 = vmatprep.subr.mxu0 0.0
        %846 = vmatpush1.msra.mxu0 0.0
        %847 = vmatprep.subr.mxu0 0.0
        %848 = vmatpush1.msra.mxu0 0.0
        %849 = vmatprep.subr.mxu0 0.0
        %850 = vmatpush1.msra.mxu0 0.0
        %851 = vmatprep.subr.mxu0 0.0
        %852 = vmatpush1.msra.mxu0 0.0
        %853 = vmatprep.subr.mxu0 0.0
        %854 = vmatpush1.msra.mxu0 0.0
        %855 = vmatprep.subr.mxu0 0.0
        %856 = vmatpush1.msra.mxu0 0.0
        %857 = vmatprep.subr.mxu0 0.0
        %858 = vmatpush1.msra.mxu0 0.0
        %859 = vmatprep.subr.mxu0 0.0
        %860 = vmatpush1.msra.mxu0 0.0
        %861 = vmatprep.subr.mxu0 0.0
        %862 = vmatpush1.msra.mxu0 0.0
        %863 = vmatprep.subr.mxu0 0.0
        %864 = vmatpush1.msra.mxu0 0.0
        %865 = vmatprep.subr.mxu0 0.0
        %866 = vmatpush1.msra.mxu0 0.0
        %867 = vmatprep.subr.mxu0 0.0
        %868 = vmatpush1.msra.mxu0 0.0
        %869 = vmatprep.mubr.f32.mxu0 0.0
        %870 = vmatmul.mubr.f32.gmra.mrb[0].mxu0 %v752
        %v871 = vpop.f32.mrb[0].mxu0
        %v872 = vadd.f32 0.0, %v871
        %v873 = vpop.f32.mrb[0].mxu0
        %874 = vmatprep.mubr.f32.mxu0 0.0
        %875 = vmatmul.mubr.f32.gmra.mrb[0].mxu0 %v755
        %v876 = vpop.f32.mrb[0].mxu0
        %v877 = vadd.f32 0.0, %v876
        %v878 = vpop.f32.mrb[0].mxu0
        %879 = vmatprep.mubr.f32.mxu0 0.0
        %880 = vmatmul.mubr.f32.gmra.mrb[0].mxu0 %v758
        %v881 = vpop.f32.mrb[0].mxu0
        %v882 = vadd.f32 0.0, %v881
        %v883 = vpop.f32.mrb[0].mxu0
        %884 = vmatprep.mubr.f32.mxu0 0.0
        %885 = vmatmul.mubr.f32.gmra.mrb[0].mxu0 %v761
        %v886 = vpop.f32.mrb[0].mxu0
        %v887 = vadd.f32 0.0, %v886
        %v888 = vpop.f32.mrb[0].mxu0
        %889 = vmatprep.mubr.f32.mxu0 0.0
        %890 = vmatmul.mubr.f32.gmra.mrb[0].mxu0 %v764
        %v891 = vpop.f32.mrb[0].mxu0
        %v892 = vadd.f32 0.0, %v891
        %v893 = vpop.f32.mrb[0].mxu0
        %894 = vmatprep.mubr.f32.mxu0 0.0
        %895 = vmatmul.mubr.f32.gmra.mrb[0].mxu0 %v767
        %v896 = vpop.f32.mrb[0].mxu0
        %v897 = vadd.f32 0.0, %v896
        %v898 = vpop.f32.mrb[0].mxu0
        %899 = vmatprep.mubr.f32.mxu0 0.0
        %900 = vmatmul.mubr.f32.gmra.mrb[0].mxu0 %v770
        %v901 = vpop.f32.mrb[0].mxu0
        %v902 = vadd.f32 0.0, %v901
        %v903 = vpop.f32.mrb[0].mxu0
        %904 = vmatprep.mubr.f32.mxu0 0.0
        %905 = vmatmul.mubr.f32.gmra.mrb[0].mxu0 %v773
        %v906 = vpop.f32.mrb[0].mxu0
        %v907 = vadd.f32 0.0, %v906
        %v908 = vpop.f32.mrb[0].mxu0
        %909 = vmatprep.mubr.f32.mxu0 0.0
        %910 = vmatmul.mubr.f32.gmra.mrb[0].mxu0 %v776
        %v911 = vpop.f32.mrb[0].mxu0
        %v912 = vadd.f32 0.0, %v911
        %v913 = vpop.f32.mrb[0].mxu0
        %914 = vmatprep.mubr.f32.mxu0 0.0
        %915 = vmatmul.mubr.f32.gmra.mrb[0].mxu0 %v779
        %v916 = vpop.f32.mrb[0].mxu0
        %v917 = vadd.f32 0.0, %v916
        %v918 = vpop.f32.mrb[0].mxu0
        %919 = vmatprep.mubr.f32.mxu0 0.0
        %920 = vmatmul.mubr.f32.gmra.mrb[0].mxu0 %v782
        %v921 = vpop.f32.mrb[0].mxu0
        %v922 = vadd.f32 0.0, %v921
        %v923 = vpop.f32.mrb[0].mxu0
        %924 = vmatprep.mubr.f32.mxu0 0.0
        %925 = vmatmul.mubr.f32.gmra.mrb[0].mxu0 %v785
        %v926 = vpop.f32.mrb[0].mxu0
        %v927 = vadd.f32 0.0, %v926
        %v928 = vpop.f32.mrb[0].mxu0
        %929 = vmatprep.mubr.f32.mxu0 0.0
        %930 = vmatmul.mubr.f32.gmra.mrb[0].mxu0 %v788
        %v931 = vpop.f32.mrb[0].mxu0
        %v932 = vadd.f32 0.0, %v931
        %v933 = vpop.f32.mrb[0].mxu0
        %934 = vmatprep.mubr.f32.mxu0 0.0
        %935 = vmatmul.mubr.f32.gmra.mrb[0].mxu0 %v791
        %v936 = vpop.f32.mrb[0].mxu0
        %v937 = vadd.f32 0.0, %v936
        %v938 = vpop.f32.mrb[0].mxu0
        %939 = vmatprep.mubr.f32.mxu0 0.0
        %940 = vmatmul.mubr.f32.gmra.mrb[0].mxu0 %v794
        %v941 = vpop.f32.mrb[0].mxu0
        %v942 = vadd.f32 0.0, %v941
        %v943 = vpop.f32.mrb[0].mxu0
        %944 = vmatprep.mubr.f32.mxu0 0.0
        %945 = vmatmul.mubr.f32.gmra.mrb[0].mxu0 %v797
        %v946 = vpop.f32.mrb[0].mxu0
        %v947 = vadd.f32 0.0, %v946
        %v948 = vpop.f32.mrb[0].mxu0
        %949 = vmatprep.mubr.f32.mxu0 0.0
        %950 = vmatmul.mubr.f32.gmra.mrb[0].mxu0 %v800
        %v951 = vpop.f32.mrb[0].mxu0
        %v952 = vadd.f32 0.0, %v951
        %v953 = vpop.f32.mrb[0].mxu0
        %954 = vmatprep.mubr.f32.mxu0 0.0
        %955 = vmatmul.mubr.f32.gmra.mrb[0].mxu0 %v803
        %v956 = vpop.f32.mrb[0].mxu0
        %v957 = vadd.f32 0.0, %v956
        %v958 = vpop.f32.mrb[0].mxu0
        %959 = vdwg.mxu0
        %v960 = vadd.f32 %v641, %v872
        %v961 = vadd.f32 %v646, %v877
        %v962 = vadd.f32 %v651, %v882
        %v963 = vadd.f32 %v656, %v887
        %v964 = vadd.f32 %v661, %v892
        %v965 = vadd.f32 %v666, %v897
        %v966 = vadd.f32 %v671, %v902
        %v967 = vadd.f32 %v676, %v907
        %v968 = vadd.f32 %v681, %v912
        %v969 = vadd.f32 %v686, %v917
        %v970 = vadd.f32 %v691, %v922
        %v971 = vadd.f32 %v696, %v927
        %v972 = vadd.f32 %v701, %v932
        %v973 = vadd.f32 %v706, %v937
        %v974 = vadd.f32 %v711, %v942
        %v975 = vadd.f32 %v716, %v947
        %v976 = vadd.f32 %v721, %v952
        %v977 = vadd.f32 %v726, %v957
        %s978 = sadd.s32 %s266, 1
        %s979 = smul.u32 %s978, 18
        %s980 = scalar_lea.vmem %s260, %s979
        %v981 = vld [vmem:[%s980] sm:$0xff]
        %v982 = vld [vmem:[%s980 + $0x8] sm:$0xff]
        %v983 = vld [vmem:[%s980 + $0x10] sm:$0xff]
        %v984 = vld [vmem:[%s980 + $0x18] sm:$0xff]
        %v985 = vld [vmem:[%s980 + $0x20] sm:$0xff]
        %v986 = vld [vmem:[%s980 + $0x28] sm:$0xff]
        %v987 = vld [vmem:[%s980 + $0x30] sm:$0xff]
        %v988 = vld [vmem:[%s980 + $0x38] sm:$0xff]
        %v989 = vld [vmem:[%s980 + $0x40] sm:$0xff]
        %v990 = vld [vmem:[%s980 + $0x48] sm:$0xff]
        %v991 = vld [vmem:[%s980 + $0x50] sm:$0xff]
        %v992 = vld [vmem:[%s980 + $0x58] sm:$0xff]
        %v993 = vld [vmem:[%s980 + $0x60] sm:$0xff]
        %v994 = vld [vmem:[%s980 + $0x68] sm:$0xff]
        %v995 = vld [vmem:[%s980 + $0x70] sm:$0xff]
        %v996 = vld [vmem:[%s980 + $0x78] sm:$0xff]
        %v997 = vld [vmem:[%s980 + $0x80] sm:$0xff]
        %v998 = vld [vmem:[%s980 + $0x88] sm:$0xff]
        %s999 = scalar_lea.vmem %s2, 24
        %v1000 = vld [vmem:[%s999] sm:$0xff]
        %v1002 = vsel %vm310, %v981, 0
        %v1005 = vsel %vm310, %v982, 0
        %v1008 = vsel %vm310, %v983, 0
        %v1011 = vsel %vm310, %v984, 0
        %v1014 = vsel %vm310, %v985, 0
        %v1017 = vsel %vm310, %v986, 0
        %v1020 = vsel %vm310, %v987, 0
        %v1023 = vsel %vm310, %v988, 0
        %v1026 = vsel %vm310, %v989, 0
        %v1029 = vsel %vm310, %v990, 0
        %v1032 = vsel %vm310, %v991, 0
        %v1035 = vsel %vm310, %v992, 0
        %v1038 = vsel %vm310, %v993, 0
        %v1041 = vsel %vm310, %v994, 0
        %v1044 = vsel %vm310, %v995, 0
        %v1047 = vsel %vm310, %v996, 0
        %v1050 = vsel %vm310, %v997, 0
        %v1053 = vsel %vm310, %v998, 0
        %1055 = vmatprep.subr.mxu0 0.0
        %1056 = vmatpush1.msra.mxu0 %v1000
        %1057 = vmatprep.subr.mxu0 0.0
        %1058 = vmatpush1.msra.mxu0 0.0
        %1059 = vmatprep.subr.mxu0 0.0
        %1060 = vmatpush1.msra.mxu0 0.0
        %1061 = vmatprep.subr.mxu0 0.0
        %1062 = vmatpush1.msra.mxu0 0.0
        %1063 = vmatprep.subr.mxu0 0.0
        %1064 = vmatpush1.msra.mxu0 0.0
        %1065 = vmatprep.subr.mxu0 0.0
        %1066 = vmatpush1.msra.mxu0 0.0
        %1067 = vmatprep.subr.mxu0 0.0
        %1068 = vmatpush1.msra.mxu0 0.0
        %1069 = vmatprep.subr.mxu0 0.0
        %1070 = vmatpush1.msra.mxu0 0.0
        %1071 = vmatprep.subr.mxu0 0.0
        %1072 = vmatpush1.msra.mxu0 0.0
        %1073 = vmatprep.subr.mxu0 0.0
        %1074 = vmatpush1.msra.mxu0 0.0
        %1075 = vmatprep.subr.mxu0 0.0
        %1076 = vmatpush1.msra.mxu0 0.0
        %1077 = vmatprep.subr.mxu0 0.0
        %1078 = vmatpush1.msra.mxu0 0.0
        %1079 = vmatprep.subr.mxu0 0.0
        %1080 = vmatpush1.msra.mxu0 0.0
        %1081 = vmatprep.subr.mxu0 0.0
        %1082 = vmatpush1.msra.mxu0 0.0
        %1083 = vmatprep.subr.mxu0 0.0
        %1084 = vmatpush1.msra.mxu0 0.0
        %1085 = vmatprep.subr.mxu0 0.0
        %1086 = vmatpush1.msra.mxu0 0.0
        %1087 = vmatprep.subr.mxu0 0.0
        %1088 = vmatpush1.msra.mxu0 0.0
        %1089 = vmatprep.subr.mxu0 0.0
        %1090 = vmatpush1.msra.mxu0 0.0
        %1091 = vmatprep.subr.mxu0 0.0
        %1092 = vmatpush1.msra.mxu0 0.0
        %1093 = vmatprep.subr.mxu0 0.0
        %1094 = vmatpush1.msra.mxu0 0.0
        %1095 = vmatprep.subr.mxu0 0.0
        %1096 = vmatpush1.msra.mxu0 0.0
        %1097 = vmatprep.subr.mxu0 0.0
        %1098 = vmatpush1.msra.mxu0 0.0
        %1099 = vmatprep.subr.mxu0 0.0
        %1100 = vmatpush1.msra.mxu0 0.0
        %1101 = vmatprep.subr.mxu0 0.0
        %1102 = vmatpush1.msra.mxu0 0.0
        %1103 = vmatprep.subr.mxu0 0.0
        %1104 = vmatpush1.msra.mxu0 0.0
        %1105 = vmatprep.subr.mxu0 0.0
        %1106 = vmatpush1.msra.mxu0 0.0
        %1107 = vmatprep.subr.mxu0 0.0
        %1108 = vmatpush1.msra.mxu0 0.0
        %1109 = vmatprep.subr.mxu0 0.0
        %1110 = vmatpush1.msra.mxu0 0.0
        %1111 = vmatprep.subr.mxu0 0.0
        %1112 = vmatpush1.msra.mxu0 0.0
        %1113 = vmatprep.subr.mxu0 0.0
        %1114 = vmatpush1.msra.mxu0 0.0
        %1115 = vmatprep.subr.mxu0 0.0
        %1116 = vmatpush1.msra.mxu0 0.0
        %1117 = vmatprep.subr.mxu0 0.0
        %1118 = vmatpush1.msra.mxu0 0.0
        %1119 = vmatprep.mubr.f32.mxu0 0.0
        %1120 = vmatmul.mubr.f32.gmra.mrb[0].mxu0 %v1002
        %v1121 = vpop.f32.mrb[0].mxu0
        %v1122 = vadd.f32 0.0, %v1121
        %v1123 = vpop.f32.mrb[0].mxu0
        %1124 = vmatprep.mubr.f32.mxu0 0.0
        %1125 = vmatmul.mubr.f32.gmra.mrb[0].mxu0 %v1005
        %v1126 = vpop.f32.mrb[0].mxu0
        %v1127 = vadd.f32 0.0, %v1126
        %v1128 = vpop.f32.mrb[0].mxu0
        %1129 = vmatprep.mubr.f32.mxu0 0.0
        %1130 = vmatmul.mubr.f32.gmra.mrb[0].mxu0 %v1008
        %v1131 = vpop.f32.mrb[0].mxu0
        %v1132 = vadd.f32 0.0, %v1131
        %v1133 = vpop.f32.mrb[0].mxu0
        %1134 = vmatprep.mubr.f32.mxu0 0.0
        %1135 = vmatmul.mubr.f32.gmra.mrb[0].mxu0 %v1011
        %v1136 = vpop.f32.mrb[0].mxu0
        %v1137 = vadd.f32 0.0, %v1136
        %v1138 = vpop.f32.mrb[0].mxu0
        %1139 = vmatprep.mubr.f32.mxu0 0.0
        %1140 = vmatmul.mubr.f32.gmra.mrb[0].mxu0 %v1014
        %v1141 = vpop.f32.mrb[0].mxu0
        %v1142 = vadd.f32 0.0, %v1141
        %v1143 = vpop.f32.mrb[0].mxu0
        %1144 = vmatprep.mubr.f32.mxu0 0.0
        %1145 = vmatmul.mubr.f32.gmra.mrb[0].mxu0 %v1017
        %v1146 = vpop.f32.mrb[0].mxu0
        %v1147 = vadd.f32 0.0, %v1146
        %v1148 = vpop.f32.mrb[0].mxu0
        %1149 = vmatprep.mubr.f32.mxu0 0.0
        %1150 = vmatmul.mubr.f32.gmra.mrb[0].mxu0 %v1020
        %v1151 = vpop.f32.mrb[0].mxu0
        %v1152 = vadd.f32 0.0, %v1151
        %v1153 = vpop.f32.mrb[0].mxu0
        %1154 = vmatprep.mubr.f32.mxu0 0.0
        %1155 = vmatmul.mubr.f32.gmra.mrb[0].mxu0 %v1023
        %v1156 = vpop.f32.mrb[0].mxu0
        %v1157 = vadd.f32 0.0, %v1156
        %v1158 = vpop.f32.mrb[0].mxu0
        %1159 = vmatprep.mubr.f32.mxu0 0.0
        %1160 = vmatmul.mubr.f32.gmra.mrb[0].mxu0 %v1026
        %v1161 = vpop.f32.mrb[0].mxu0
        %v1162 = vadd.f32 0.0, %v1161
        %v1163 = vpop.f32.mrb[0].mxu0
        %1164 = vmatprep.mubr.f32.mxu0 0.0
        %1165 = vmatmul.mubr.f32.gmra.mrb[0].mxu0 %v1029
        %v1166 = vpop.f32.mrb[0].mxu0
        %v1167 = vadd.f32 0.0, %v1166
        %v1168 = vpop.f32.mrb[0].mxu0
        %1169 = vmatprep.mubr.f32.mxu0 0.0
        %1170 = vmatmul.mubr.f32.gmra.mrb[0].mxu0 %v1032
        %v1171 = vpop.f32.mrb[0].mxu0
        %v1172 = vadd.f32 0.0, %v1171
        %v1173 = vpop.f32.mrb[0].mxu0
        %1174 = vmatprep.mubr.f32.mxu0 0.0
        %1175 = vmatmul.mubr.f32.gmra.mrb[0].mxu0 %v1035
        %v1176 = vpop.f32.mrb[0].mxu0
        %v1177 = vadd.f32 0.0, %v1176
        %v1178 = vpop.f32.mrb[0].mxu0
        %1179 = vmatprep.mubr.f32.mxu0 0.0
        %1180 = vmatmul.mubr.f32.gmra.mrb[0].mxu0 %v1038
        %v1181 = vpop.f32.mrb[0].mxu0
        %v1182 = vadd.f32 0.0, %v1181
        %v1183 = vpop.f32.mrb[0].mxu0
        %1184 = vmatprep.mubr.f32.mxu0 0.0
        %1185 = vmatmul.mubr.f32.gmra.mrb[0].mxu0 %v1041
        %v1186 = vpop.f32.mrb[0].mxu0
        %v1187 = vadd.f32 0.0, %v1186
        %v1188 = vpop.f32.mrb[0].mxu0
        %1189 = vmatprep.mubr.f32.mxu0 0.0
        %1190 = vmatmul.mubr.f32.gmra.mrb[0].mxu0 %v1044
        %v1191 = vpop.f32.mrb[0].mxu0
        %v1192 = vadd.f32 0.0, %v1191
        %v1193 = vpop.f32.mrb[0].mxu0
        %1194 = vmatprep.mubr.f32.mxu0 0.0
        %1195 = vmatmul.mubr.f32.gmra.mrb[0].mxu0 %v1047
        %v1196 = vpop.f32.mrb[0].mxu0
        %v1197 = vadd.f32 0.0, %v1196
        %v1198 = vpop.f32.mrb[0].mxu0
        %1199 = vmatprep.mubr.f32.mxu0 0.0
        %1200 = vmatmul.mubr.f32.gmra.mrb[0].mxu0 %v1050
        %v1201 = vpop.f32.mrb[0].mxu0
        %v1202 = vadd.f32 0.0, %v1201
        %v1203 = vpop.f32.mrb[0].mxu0
        %1204 = vmatprep.mubr.f32.mxu0 0.0
        %1205 = vmatmul.mubr.f32.gmra.mrb[0].mxu0 %v1053
        %v1206 = vpop.f32.mrb[0].mxu0
        %v1207 = vadd.f32 0.0, %v1206
        %v1208 = vpop.f32.mrb[0].mxu0
        %1209 = vdwg.mxu0
        %v1210 = vadd.f32 %v960, %v1122
        %v1211 = vadd.f32 %v961, %v1127
        %v1212 = vadd.f32 %v962, %v1132
        %v1213 = vadd.f32 %v963, %v1137
        %v1214 = vadd.f32 %v964, %v1142
        %v1215 = vadd.f32 %v965, %v1147
        %v1216 = vadd.f32 %v966, %v1152
        %v1217 = vadd.f32 %v967, %v1157
        %v1218 = vadd.f32 %v968, %v1162
        %v1219 = vadd.f32 %v969, %v1167
        %v1220 = vadd.f32 %v970, %v1172
        %v1221 = vadd.f32 %v971, %v1177
        %v1222 = vadd.f32 %v972, %v1182
        %v1223 = vadd.f32 %v973, %v1187
        %v1224 = vadd.f32 %v974, %v1192
        %v1225 = vadd.f32 %v975, %v1197
        %v1226 = vadd.f32 %v976, %v1202
        %v1227 = vadd.f32 %v977, %v1207
        %s1228 = sadd.s32 %s979, 1
        %s1229 = scalar_lea.vmem %s260, %s1228
        %v1230 = vld [vmem:[%s1229] sm:$0xff]
        %v1231 = vld [vmem:[%s1229 + $0x8] sm:$0xff]
        %v1232 = vld [vmem:[%s1229 + $0x10] sm:$0xff]
        %v1233 = vld [vmem:[%s1229 + $0x18] sm:$0xff]
        %v1234 = vld [vmem:[%s1229 + $0x20] sm:$0xff]
        %v1235 = vld [vmem:[%s1229 + $0x28] sm:$0xff]
        %v1236 = vld [vmem:[%s1229 + $0x30] sm:$0xff]
        %v1237 = vld [vmem:[%s1229 + $0x38] sm:$0xff]
        %v1238 = vld [vmem:[%s1229 + $0x40] sm:$0xff]
        %v1239 = vld [vmem:[%s1229 + $0x48] sm:$0xff]
        %v1240 = vld [vmem:[%s1229 + $0x50] sm:$0xff]
        %v1241 = vld [vmem:[%s1229 + $0x58] sm:$0xff]
        %v1242 = vld [vmem:[%s1229 + $0x60] sm:$0xff]
        %v1243 = vld [vmem:[%s1229 + $0x68] sm:$0xff]
        %v1244 = vld [vmem:[%s1229 + $0x70] sm:$0xff]
        %v1245 = vld [vmem:[%s1229 + $0x78] sm:$0xff]
        %v1246 = vld [vmem:[%s1229 + $0x80] sm:$0xff]
        %v1247 = vld [vmem:[%s1229 + $0x88] sm:$0xff]
        %s1248 = scalar_lea.vmem %s2, 32
        %v1249 = vld [vmem:[%s1248] sm:$0xff]
        %v1251 = vsel %vm310, %v1230, 0
        %v1254 = vsel %vm310, %v1231, 0
        %v1257 = vsel %vm310, %v1232, 0
        %v1260 = vsel %vm310, %v1233, 0
        %v1263 = vsel %vm310, %v1234, 0
        %v1266 = vsel %vm310, %v1235, 0
        %v1269 = vsel %vm310, %v1236, 0
        %v1272 = vsel %vm310, %v1237, 0
        %v1275 = vsel %vm310, %v1238, 0
        %v1278 = vsel %vm310, %v1239, 0
        %v1281 = vsel %vm310, %v1240, 0
        %v1284 = vsel %vm310, %v1241, 0
        %v1287 = vsel %vm310, %v1242, 0
        %v1290 = vsel %vm310, %v1243, 0
        %v1293 = vsel %vm310, %v1244, 0
        %v1296 = vsel %vm310, %v1245, 0
        %v1299 = vsel %vm310, %v1246, 0
        %v1302 = vsel %vm310, %v1247, 0
        %1304 = vmatprep.subr.mxu0 0.0
        %1305 = vmatpush1.msra.mxu0 %v1249
        %1306 = vmatprep.subr.mxu0 0.0
        %1307 = vmatpush1.msra.mxu0 0.0
        %1308 = vmatprep.subr.mxu0 0.0
        %1309 = vmatpush1.msra.mxu0 0.0
        %1310 = vmatprep.subr.mxu0 0.0
        %1311 = vmatpush1.msra.mxu0 0.0
        %1312 = vmatprep.subr.mxu0 0.0
        %1313 = vmatpush1.msra.mxu0 0.0
        %1314 = vmatprep.subr.mxu0 0.0
        %1315 = vmatpush1.msra.mxu0 0.0
        %1316 = vmatprep.subr.mxu0 0.0
        %1317 = vmatpush1.msra.mxu0 0.0
        %1318 = vmatprep.subr.mxu0 0.0
        %1319 = vmatpush1.msra.mxu0 0.0
        %1320 = vmatprep.subr.mxu0 0.0
        %1321 = vmatpush1.msra.mxu0 0.0
        %1322 = vmatprep.subr.mxu0 0.0
        %1323 = vmatpush1.msra.mxu0 0.0
        %1324 = vmatprep.subr.mxu0 0.0
        %1325 = vmatpush1.msra.mxu0 0.0
        %1326 = vmatprep.subr.mxu0 0.0
        %1327 = vmatpush1.msra.mxu0 0.0
        %1328 = vmatprep.subr.mxu0 0.0
        %1329 = vmatpush1.msra.mxu0 0.0
        %1330 = vmatprep.subr.mxu0 0.0
        %1331 = vmatpush1.msra.mxu0 0.0
        %1332 = vmatprep.subr.mxu0 0.0
        %1333 = vmatpush1.msra.mxu0 0.0
        %1334 = vmatprep.subr.mxu0 0.0
        %1335 = vmatpush1.msra.mxu0 0.0
        %1336 = vmatprep.subr.mxu0 0.0
        %1337 = vmatpush1.msra.mxu0 0.0
        %1338 = vmatprep.subr.mxu0 0.0
        %1339 = vmatpush1.msra.mxu0 0.0
        %1340 = vmatprep.subr.mxu0 0.0
        %1341 = vmatpush1.msra.mxu0 0.0
        %1342 = vmatprep.subr.mxu0 0.0
        %1343 = vmatpush1.msra.mxu0 0.0
        %1344 = vmatprep.subr.mxu0 0.0
        %1345 = vmatpush1.msra.mxu0 0.0
        %1346 = vmatprep.subr.mxu0 0.0
        %1347 = vmatpush1.msra.mxu0 0.0
        %1348 = vmatprep.subr.mxu0 0.0
        %1349 = vmatpush1.msra.mxu0 0.0
        %1350 = vmatprep.subr.mxu0 0.0
        %1351 = vmatpush1.msra.mxu0 0.0
        %1352 = vmatprep.subr.mxu0 0.0
        %1353 = vmatpush1.msra.mxu0 0.0
        %1354 = vmatprep.subr.mxu0 0.0
        %1355 = vmatpush1.msra.mxu0 0.0
        %1356 = vmatprep.subr.mxu0 0.0
        %1357 = vmatpush1.msra.mxu0 0.0
        %1358 = vmatprep.subr.mxu0 0.0
        %1359 = vmatpush1.msra.mxu0 0.0
        %1360 = vmatprep.subr.mxu0 0.0
        %1361 = vmatpush1.msra.mxu0 0.0
        %1362 = vmatprep.subr.mxu0 0.0
        %1363 = vmatpush1.msra.mxu0 0.0
        %1364 = vmatprep.subr.mxu0 0.0
        %1365 = vmatpush1.msra.mxu0 0.0
        %1366 = vmatprep.subr.mxu0 0.0
        %1367 = vmatpush1.msra.mxu0 0.0
        %1368 = vmatprep.mubr.f32.mxu0 0.0
        %1369 = vmatmul.mubr.f32.gmra.mrb[0].mxu0 %v1251
        %v1370 = vpop.f32.mrb[0].mxu0
        %v1371 = vadd.f32 0.0, %v1370
        %v1372 = vpop.f32.mrb[0].mxu0
        %1373 = vmatprep.mubr.f32.mxu0 0.0
        %1374 = vmatmul.mubr.f32.gmra.mrb[0].mxu0 %v1254
        %v1375 = vpop.f32.mrb[0].mxu0
        %v1376 = vadd.f32 0.0, %v1375
        %v1377 = vpop.f32.mrb[0].mxu0
        %1378 = vmatprep.mubr.f32.mxu0 0.0
        %1379 = vmatmul.mubr.f32.gmra.mrb[0].mxu0 %v1257
        %v1380 = vpop.f32.mrb[0].mxu0
        %v1381 = vadd.f32 0.0, %v1380
        %v1382 = vpop.f32.mrb[0].mxu0
        %1383 = vmatprep.mubr.f32.mxu0 0.0
        %1384 = vmatmul.mubr.f32.gmra.mrb[0].mxu0 %v1260
        %v1385 = vpop.f32.mrb[0].mxu0
        %v1386 = vadd.f32 0.0, %v1385
        %v1387 = vpop.f32.mrb[0].mxu0
        %1388 = vmatprep.mubr.f32.mxu0 0.0
        %1389 = vmatmul.mubr.f32.gmra.mrb[0].mxu0 %v1263
        %v1390 = vpop.f32.mrb[0].mxu0
        %v1391 = vadd.f32 0.0, %v1390
        %v1392 = vpop.f32.mrb[0].mxu0
        %1393 = vmatprep.mubr.f32.mxu0 0.0
        %1394 = vmatmul.mubr.f32.gmra.mrb[0].mxu0 %v1266
        %v1395 = vpop.f32.mrb[0].mxu0
        %v1396 = vadd.f32 0.0, %v1395
        %v1397 = vpop.f32.mrb[0].mxu0
        %1398 = vmatprep.mubr.f32.mxu0 0.0
        %1399 = vmatmul.mubr.f32.gmra.mrb[0].mxu0 %v1269
        %v1400 = vpop.f32.mrb[0].mxu0
        %v1401 = vadd.f32 0.0, %v1400
        %v1402 = vpop.f32.mrb[0].mxu0
        %1403 = vmatprep.mubr.f32.mxu0 0.0
        %1404 = vmatmul.mubr.f32.gmra.mrb[0].mxu0 %v1272
        %v1405 = vpop.f32.mrb[0].mxu0
        %v1406 = vadd.f32 0.0, %v1405
        %v1407 = vpop.f32.mrb[0].mxu0
        %1408 = vmatprep.mubr.f32.mxu0 0.0
        %1409 = vmatmul.mubr.f32.gmra.mrb[0].mxu0 %v1275
        %v1410 = vpop.f32.mrb[0].mxu0
        %v1411 = vadd.f32 0.0, %v1410
        %v1412 = vpop.f32.mrb[0].mxu0
        %1413 = vmatprep.mubr.f32.mxu0 0.0
        %1414 = vmatmul.mubr.f32.gmra.mrb[0].mxu0 %v1278
        %v1415 = vpop.f32.mrb[0].mxu0
        %v1416 = vadd.f32 0.0, %v1415
        %v1417 = vpop.f32.mrb[0].mxu0
        %1418 = vmatprep.mubr.f32.mxu0 0.0
        %1419 = vmatmul.mubr.f32.gmra.mrb[0].mxu0 %v1281
        %v1420 = vpop.f32.mrb[0].mxu0
        %v1421 = vadd.f32 0.0, %v1420
        %v1422 = vpop.f32.mrb[0].mxu0
        %1423 = vmatprep.mubr.f32.mxu0 0.0
        %1424 = vmatmul.mubr.f32.gmra.mrb[0].mxu0 %v1284
        %v1425 = vpop.f32.mrb[0].mxu0
        %v1426 = vadd.f32 0.0, %v1425
        %v1427 = vpop.f32.mrb[0].mxu0
        %1428 = vmatprep.mubr.f32.mxu0 0.0
        %1429 = vmatmul.mubr.f32.gmra.mrb[0].mxu0 %v1287
        %v1430 = vpop.f32.mrb[0].mxu0
        %v1431 = vadd.f32 0.0, %v1430
        %v1432 = vpop.f32.mrb[0].mxu0
        %1433 = vmatprep.mubr.f32.mxu0 0.0
        %1434 = vmatmul.mubr.f32.gmra.mrb[0].mxu0 %v1290
        %v1435 = vpop.f32.mrb[0].mxu0
        %v1436 = vadd.f32 0.0, %v1435
        %v1437 = vpop.f32.mrb[0].mxu0
        %1438 = vmatprep.mubr.f32.mxu0 0.0
        %1439 = vmatmul.mubr.f32.gmra.mrb[0].mxu0 %v1293
        %v1440 = vpop.f32.mrb[0].mxu0
        %v1441 = vadd.f32 0.0, %v1440
        %v1442 = vpop.f32.mrb[0].mxu0
        %1443 = vmatprep.mubr.f32.mxu0 0.0
        %1444 = vmatmul.mubr.f32.gmra.mrb[0].mxu0 %v1296
        %v1445 = vpop.f32.mrb[0].mxu0
        %v1446 = vadd.f32 0.0, %v1445
        %v1447 = vpop.f32.mrb[0].mxu0
        %1448 = vmatprep.mubr.f32.mxu0 0.0
        %1449 = vmatmul.mubr.f32.gmra.mrb[0].mxu0 %v1299
        %v1450 = vpop.f32.mrb[0].mxu0
        %v1451 = vadd.f32 0.0, %v1450
        %v1452 = vpop.f32.mrb[0].mxu0
        %1453 = vmatprep.mubr.f32.mxu0 0.0
        %1454 = vmatmul.mubr.f32.gmra.mrb[0].mxu0 %v1302
        %v1455 = vpop.f32.mrb[0].mxu0
        %v1456 = vadd.f32 0.0, %v1455
        %v1457 = vpop.f32.mrb[0].mxu0
        %1458 = vdwg.mxu0
        %v1459 = vadd.f32 %v1210, %v1371
        %v1460 = vadd.f32 %v1211, %v1376
        %v1461 = vadd.f32 %v1212, %v1381
        %v1462 = vadd.f32 %v1213, %v1386
        %v1463 = vadd.f32 %v1214, %v1391
        %v1464 = vadd.f32 %v1215, %v1396
        %v1465 = vadd.f32 %v1216, %v1401
        %v1466 = vadd.f32 %v1217, %v1406
        %v1467 = vadd.f32 %v1218, %v1411
        %v1468 = vadd.f32 %v1219, %v1416
        %v1469 = vadd.f32 %v1220, %v1421
        %v1470 = vadd.f32 %v1221, %v1426
        %v1471 = vadd.f32 %v1222, %v1431
        %v1472 = vadd.f32 %v1223, %v1436
        %v1473 = vadd.f32 %v1224, %v1441
        %v1474 = vadd.f32 %v1225, %v1446
        %v1475 = vadd.f32 %v1226, %v1451
        %v1476 = vadd.f32 %v1227, %v1456
        %s1477 = sadd.s32 %s979, 2
        %s1478 = scalar_lea.vmem %s260, %s1477
        %v1479 = vld [vmem:[%s1478] sm:$0xff]
        %v1480 = vld [vmem:[%s1478 + $0x8] sm:$0xff]
        %v1481 = vld [vmem:[%s1478 + $0x10] sm:$0xff]
        %v1482 = vld [vmem:[%s1478 + $0x18] sm:$0xff]
        %v1483 = vld [vmem:[%s1478 + $0x20] sm:$0xff]
        %v1484 = vld [vmem:[%s1478 + $0x28] sm:$0xff]
        %v1485 = vld [vmem:[%s1478 + $0x30] sm:$0xff]
        %v1486 = vld [vmem:[%s1478 + $0x38] sm:$0xff]
        %v1487 = vld [vmem:[%s1478 + $0x40] sm:$0xff]
        %v1488 = vld [vmem:[%s1478 + $0x48] sm:$0xff]
        %v1489 = vld [vmem:[%s1478 + $0x50] sm:$0xff]
        %v1490 = vld [vmem:[%s1478 + $0x58] sm:$0xff]
        %v1491 = vld [vmem:[%s1478 + $0x60] sm:$0xff]
        %v1492 = vld [vmem:[%s1478 + $0x68] sm:$0xff]
        %v1493 = vld [vmem:[%s1478 + $0x70] sm:$0xff]
        %v1494 = vld [vmem:[%s1478 + $0x78] sm:$0xff]
        %v1495 = vld [vmem:[%s1478 + $0x80] sm:$0xff]
        %v1496 = vld [vmem:[%s1478 + $0x88] sm:$0xff]
        %s1497 = scalar_lea.vmem %s2, 40
        %v1498 = vld [vmem:[%s1497] sm:$0xff]
        %v1500 = vsel %vm310, %v1479, 0
        %v1503 = vsel %vm310, %v1480, 0
        %v1506 = vsel %vm310, %v1481, 0
        %v1509 = vsel %vm310, %v1482, 0
        %v1512 = vsel %vm310, %v1483, 0
        %v1515 = vsel %vm310, %v1484, 0
        %v1518 = vsel %vm310, %v1485, 0
        %v1521 = vsel %vm310, %v1486, 0
        %v1524 = vsel %vm310, %v1487, 0
        %v1527 = vsel %vm310, %v1488, 0
        %v1530 = vsel %vm310, %v1489, 0
        %v1533 = vsel %vm310, %v1490, 0
        %v1536 = vsel %vm310, %v1491, 0
        %v1539 = vsel %vm310, %v1492, 0
        %v1542 = vsel %vm310, %v1493, 0
        %v1545 = vsel %vm310, %v1494, 0
        %v1548 = vsel %vm310, %v1495, 0
        %v1551 = vsel %vm310, %v1496, 0
        %1553 = vmatprep.subr.mxu0 0.0
        %1554 = vmatpush1.msra.mxu0 %v1498
        %1555 = vmatprep.subr.mxu0 0.0
        %1556 = vmatpush1.msra.mxu0 0.0
        %1557 = vmatprep.subr.mxu0 0.0
        %1558 = vmatpush1.msra.mxu0 0.0
        %1559 = vmatprep.subr.mxu0 0.0
        %1560 = vmatpush1.msra.mxu0 0.0
        %1561 = vmatprep.subr.mxu0 0.0
        %1562 = vmatpush1.msra.mxu0 0.0
        %1563 = vmatprep.subr.mxu0 0.0
        %1564 = vmatpush1.msra.mxu0 0.0
        %1565 = vmatprep.subr.mxu0 0.0
        %1566 = vmatpush1.msra.mxu0 0.0
        %1567 = vmatprep.subr.mxu0 0.0
        %1568 = vmatpush1.msra.mxu0 0.0
        %1569 = vmatprep.subr.mxu0 0.0
        %1570 = vmatpush1.msra.mxu0 0.0
        %1571 = vmatprep.subr.mxu0 0.0
        %1572 = vmatpush1.msra.mxu0 0.0
        %1573 = vmatprep.subr.mxu0 0.0
        %1574 = vmatpush1.msra.mxu0 0.0
        %1575 = vmatprep.subr.mxu0 0.0
        %1576 = vmatpush1.msra.mxu0 0.0
        %1577 = vmatprep.subr.mxu0 0.0
        %1578 = vmatpush1.msra.mxu0 0.0
        %1579 = vmatprep.subr.mxu0 0.0
        %1580 = vmatpush1.msra.mxu0 0.0
        %1581 = vmatprep.subr.mxu0 0.0
        %1582 = vmatpush1.msra.mxu0 0.0
        %1583 = vmatprep.subr.mxu0 0.0
        %1584 = vmatpush1.msra.mxu0 0.0
        %1585 = vmatprep.subr.mxu0 0.0
        %1586 = vmatpush1.msra.mxu0 0.0
        %1587 = vmatprep.subr.mxu0 0.0
        %1588 = vmatpush1.msra.mxu0 0.0
        %1589 = vmatprep.subr.mxu0 0.0
        %1590 = vmatpush1.msra.mxu0 0.0
        %1591 = vmatprep.subr.mxu0 0.0
        %1592 = vmatpush1.msra.mxu0 0.0
        %1593 = vmatprep.subr.mxu0 0.0
        %1594 = vmatpush1.msra.mxu0 0.0
        %1595 = vmatprep.subr.mxu0 0.0
        %1596 = vmatpush1.msra.mxu0 0.0
        %1597 = vmatprep.subr.mxu0 0.0
        %1598 = vmatpush1.msra.mxu0 0.0
        %1599 = vmatprep.subr.mxu0 0.0
        %1600 = vmatpush1.msra.mxu0 0.0
        %1601 = vmatprep.subr.mxu0 0.0
        %1602 = vmatpush1.msra.mxu0 0.0
        %1603 = vmatprep.subr.mxu0 0.0
        %1604 = vmatpush1.msra.mxu0 0.0
        %1605 = vmatprep.subr.mxu0 0.0
        %1606 = vmatpush1.msra.mxu0 0.0
        %1607 = vmatprep.subr.mxu0 0.0
        %1608 = vmatpush1.msra.mxu0 0.0
        %1609 = vmatprep.subr.mxu0 0.0
        %1610 = vmatpush1.msra.mxu0 0.0
        %1611 = vmatprep.subr.mxu0 0.0
        %1612 = vmatpush1.msra.mxu0 0.0
        %1613 = vmatprep.subr.mxu0 0.0
        %1614 = vmatpush1.msra.mxu0 0.0
        %1615 = vmatprep.subr.mxu0 0.0
        %1616 = vmatpush1.msra.mxu0 0.0
        %1617 = vmatprep.mubr.f32.mxu0 0.0
        %1618 = vmatmul.mubr.f32.gmra.mrb[0].mxu0 %v1500
        %v1619 = vpop.f32.mrb[0].mxu0
        %v1620 = vadd.f32 0.0, %v1619
        %v1621 = vpop.f32.mrb[0].mxu0
        %1622 = vmatprep.mubr.f32.mxu0 0.0
        %1623 = vmatmul.mubr.f32.gmra.mrb[0].mxu0 %v1503
        %v1624 = vpop.f32.mrb[0].mxu0
        %v1625 = vadd.f32 0.0, %v1624
        %v1626 = vpop.f32.mrb[0].mxu0
        %1627 = vmatprep.mubr.f32.mxu0 0.0
        %1628 = vmatmul.mubr.f32.gmra.mrb[0].mxu0 %v1506
        %v1629 = vpop.f32.mrb[0].mxu0
        %v1630 = vadd.f32 0.0, %v1629
        %v1631 = vpop.f32.mrb[0].mxu0
        %1632 = vmatprep.mubr.f32.mxu0 0.0
        %1633 = vmatmul.mubr.f32.gmra.mrb[0].mxu0 %v1509
        %v1634 = vpop.f32.mrb[0].mxu0
        %v1635 = vadd.f32 0.0, %v1634
        %v1636 = vpop.f32.mrb[0].mxu0
        %1637 = vmatprep.mubr.f32.mxu0 0.0
        %1638 = vmatmul.mubr.f32.gmra.mrb[0].mxu0 %v1512
        %v1639 = vpop.f32.mrb[0].mxu0
        %v1640 = vadd.f32 0.0, %v1639
        %v1641 = vpop.f32.mrb[0].mxu0
        %1642 = vmatprep.mubr.f32.mxu0 0.0
        %1643 = vmatmul.mubr.f32.gmra.mrb[0].mxu0 %v1515
        %v1644 = vpop.f32.mrb[0].mxu0
        %v1645 = vadd.f32 0.0, %v1644
        %v1646 = vpop.f32.mrb[0].mxu0
        %1647 = vmatprep.mubr.f32.mxu0 0.0
        %1648 = vmatmul.mubr.f32.gmra.mrb[0].mxu0 %v1518
        %v1649 = vpop.f32.mrb[0].mxu0
        %v1650 = vadd.f32 0.0, %v1649
        %v1651 = vpop.f32.mrb[0].mxu0
        %1652 = vmatprep.mubr.f32.mxu0 0.0
        %1653 = vmatmul.mubr.f32.gmra.mrb[0].mxu0 %v1521
        %v1654 = vpop.f32.mrb[0].mxu0
        %v1655 = vadd.f32 0.0, %v1654
        %v1656 = vpop.f32.mrb[0].mxu0
        %1657 = vmatprep.mubr.f32.mxu0 0.0
        %1658 = vmatmul.mubr.f32.gmra.mrb[0].mxu0 %v1524
        %v1659 = vpop.f32.mrb[0].mxu0
        %v1660 = vadd.f32 0.0, %v1659
        %v1661 = vpop.f32.mrb[0].mxu0
        %1662 = vmatprep.mubr.f32.mxu0 0.0
        %1663 = vmatmul.mubr.f32.gmra.mrb[0].mxu0 %v1527
        %v1664 = vpop.f32.mrb[0].mxu0
        %v1665 = vadd.f32 0.0, %v1664
        %v1666 = vpop.f32.mrb[0].mxu0
        %1667 = vmatprep.mubr.f32.mxu0 0.0
        %1668 = vmatmul.mubr.f32.gmra.mrb[0].mxu0 %v1530
        %v1669 = vpop.f32.mrb[0].mxu0
        %v1670 = vadd.f32 0.0, %v1669
        %v1671 = vpop.f32.mrb[0].mxu0
        %1672 = vmatprep.mubr.f32.mxu0 0.0
        %1673 = vmatmul.mubr.f32.gmra.mrb[0].mxu0 %v1533
        %v1674 = vpop.f32.mrb[0].mxu0
        %v1675 = vadd.f32 0.0, %v1674
        %v1676 = vpop.f32.mrb[0].mxu0
        %1677 = vmatprep.mubr.f32.mxu0 0.0
        %1678 = vmatmul.mubr.f32.gmra.mrb[0].mxu0 %v1536
        %v1679 = vpop.f32.mrb[0].mxu0
        %v1680 = vadd.f32 0.0, %v1679
        %v1681 = vpop.f32.mrb[0].mxu0
        %1682 = vmatprep.mubr.f32.mxu0 0.0
        %1683 = vmatmul.mubr.f32.gmra.mrb[0].mxu0 %v1539
        %v1684 = vpop.f32.mrb[0].mxu0
        %v1685 = vadd.f32 0.0, %v1684
        %v1686 = vpop.f32.mrb[0].mxu0
        %1687 = vmatprep.mubr.f32.mxu0 0.0
        %1688 = vmatmul.mubr.f32.gmra.mrb[0].mxu0 %v1542
        %v1689 = vpop.f32.mrb[0].mxu0
        %v1690 = vadd.f32 0.0, %v1689
        %v1691 = vpop.f32.mrb[0].mxu0
        %1692 = vmatprep.mubr.f32.mxu0 0.0
        %1693 = vmatmul.mubr.f32.gmra.mrb[0].mxu0 %v1545
        %v1694 = vpop.f32.mrb[0].mxu0
        %v1695 = vadd.f32 0.0, %v1694
        %v1696 = vpop.f32.mrb[0].mxu0
        %1697 = vmatprep.mubr.f32.mxu0 0.0
        %1698 = vmatmul.mubr.f32.gmra.mrb[0].mxu0 %v1548
        %v1699 = vpop.f32.mrb[0].mxu0
        %v1700 = vadd.f32 0.0, %v1699
        %v1701 = vpop.f32.mrb[0].mxu0
        %1702 = vmatprep.mubr.f32.mxu0 0.0
        %1703 = vmatmul.mubr.f32.gmra.mrb[0].mxu0 %v1551
        %v1704 = vpop.f32.mrb[0].mxu0
        %v1705 = vadd.f32 0.0, %v1704
        %v1706 = vpop.f32.mrb[0].mxu0
        %1707 = vdwg.mxu0
        %v1708 = vadd.f32 %v1459, %v1620
        %v1709 = vadd.f32 %v1460, %v1625
        %v1710 = vadd.f32 %v1461, %v1630
        %v1711 = vadd.f32 %v1462, %v1635
        %v1712 = vadd.f32 %v1463, %v1640
        %v1713 = vadd.f32 %v1464, %v1645
        %v1714 = vadd.f32 %v1465, %v1650
        %v1715 = vadd.f32 %v1466, %v1655
        %v1716 = vadd.f32 %v1467, %v1660
        %v1717 = vadd.f32 %v1468, %v1665
        %v1718 = vadd.f32 %v1469, %v1670
        %v1719 = vadd.f32 %v1470, %v1675
        %v1720 = vadd.f32 %v1471, %v1680
        %v1721 = vadd.f32 %v1472, %v1685
        %v1722 = vadd.f32 %v1473, %v1690
        %v1723 = vadd.f32 %v1474, %v1695
        %v1724 = vadd.f32 %v1475, %v1700
        %v1725 = vadd.f32 %v1476, %v1705
        %s1726 = sadd.s32 %s266, 2
        %s1727 = smul.u32 %s1726, 18
        %s1728 = scalar_lea.vmem %s260, %s1727
        %v1729 = vld [vmem:[%s1728] sm:$0xff]
        %v1730 = vld [vmem:[%s1728 + $0x8] sm:$0xff]
        %v1731 = vld [vmem:[%s1728 + $0x10] sm:$0xff]
        %v1732 = vld [vmem:[%s1728 + $0x18] sm:$0xff]
        %v1733 = vld [vmem:[%s1728 + $0x20] sm:$0xff]
        %v1734 = vld [vmem:[%s1728 + $0x28] sm:$0xff]
        %v1735 = vld [vmem:[%s1728 + $0x30] sm:$0xff]
        %v1736 = vld [vmem:[%s1728 + $0x38] sm:$0xff]
        %v1737 = vld [vmem:[%s1728 + $0x40] sm:$0xff]
        %v1738 = vld [vmem:[%s1728 + $0x48] sm:$0xff]
        %v1739 = vld [vmem:[%s1728 + $0x50] sm:$0xff]
        %v1740 = vld [vmem:[%s1728 + $0x58] sm:$0xff]
        %v1741 = vld [vmem:[%s1728 + $0x60] sm:$0xff]
        %v1742 = vld [vmem:[%s1728 + $0x68] sm:$0xff]
        %v1743 = vld [vmem:[%s1728 + $0x70] sm:$0xff]
        %v1744 = vld [vmem:[%s1728 + $0x78] sm:$0xff]
        %v1745 = vld [vmem:[%s1728 + $0x80] sm:$0xff]
        %v1746 = vld [vmem:[%s1728 + $0x88] sm:$0xff]
        %s1747 = scalar_lea.vmem %s2, 48
        %v1748 = vld [vmem:[%s1747] sm:$0xff]
        %v1750 = vsel %vm310, %v1729, 0
        %v1753 = vsel %vm310, %v1730, 0
        %v1756 = vsel %vm310, %v1731, 0
        %v1759 = vsel %vm310, %v1732, 0
        %v1762 = vsel %vm310, %v1733, 0
        %v1765 = vsel %vm310, %v1734, 0
        %v1768 = vsel %vm310, %v1735, 0
        %v1771 = vsel %vm310, %v1736, 0
        %v1774 = vsel %vm310, %v1737, 0
        %v1777 = vsel %vm310, %v1738, 0
        %v1780 = vsel %vm310, %v1739, 0
        %v1783 = vsel %vm310, %v1740, 0
        %v1786 = vsel %vm310, %v1741, 0
        %v1789 = vsel %vm310, %v1742, 0
        %v1792 = vsel %vm310, %v1743, 0
        %v1795 = vsel %vm310, %v1744, 0
        %v1798 = vsel %vm310, %v1745, 0
        %v1801 = vsel %vm310, %v1746, 0
        %1803 = vmatprep.subr.mxu0 0.0
        %1804 = vmatpush1.msra.mxu0 %v1748
        %1805 = vmatprep.subr.mxu0 0.0
        %1806 = vmatpush1.msra.mxu0 0.0
        %1807 = vmatprep.subr.mxu0 0.0
        %1808 = vmatpush1.msra.mxu0 0.0
        %1809 = vmatprep.subr.mxu0 0.0
        %1810 = vmatpush1.msra.mxu0 0.0
        %1811 = vmatprep.subr.mxu0 0.0
        %1812 = vmatpush1.msra.mxu0 0.0
        %1813 = vmatprep.subr.mxu0 0.0
        %1814 = vmatpush1.msra.mxu0 0.0
        %1815 = vmatprep.subr.mxu0 0.0
        %1816 = vmatpush1.msra.mxu0 0.0
        %1817 = vmatprep.subr.mxu0 0.0
        %1818 = vmatpush1.msra.mxu0 0.0
        %1819 = vmatprep.subr.mxu0 0.0
        %1820 = vmatpush1.msra.mxu0 0.0
        %1821 = vmatprep.subr.mxu0 0.0
        %1822 = vmatpush1.msra.mxu0 0.0
        %1823 = vmatprep.subr.mxu0 0.0
        %1824 = vmatpush1.msra.mxu0 0.0
        %1825 = vmatprep.subr.mxu0 0.0
        %1826 = vmatpush1.msra.mxu0 0.0
        %1827 = vmatprep.subr.mxu0 0.0
        %1828 = vmatpush1.msra.mxu0 0.0
        %1829 = vmatprep.subr.mxu0 0.0
        %1830 = vmatpush1.msra.mxu0 0.0
        %1831 = vmatprep.subr.mxu0 0.0
        %1832 = vmatpush1.msra.mxu0 0.0
        %1833 = vmatprep.subr.mxu0 0.0
        %1834 = vmatpush1.msra.mxu0 0.0
        %1835 = vmatprep.subr.mxu0 0.0
        %1836 = vmatpush1.msra.mxu0 0.0
        %1837 = vmatprep.subr.mxu0 0.0
        %1838 = vmatpush1.msra.mxu0 0.0
        %1839 = vmatprep.subr.mxu0 0.0
        %1840 = vmatpush1.msra.mxu0 0.0
        %1841 = vmatprep.subr.mxu0 0.0
        %1842 = vmatpush1.msra.mxu0 0.0
        %1843 = vmatprep.subr.mxu0 0.0
        %1844 = vmatpush1.msra.mxu0 0.0
        %1845 = vmatprep.subr.mxu0 0.0
        %1846 = vmatpush1.msra.mxu0 0.0
        %1847 = vmatprep.subr.mxu0 0.0
        %1848 = vmatpush1.msra.mxu0 0.0
        %1849 = vmatprep.subr.mxu0 0.0
        %1850 = vmatpush1.msra.mxu0 0.0
        %1851 = vmatprep.subr.mxu0 0.0
        %1852 = vmatpush1.msra.mxu0 0.0
        %1853 = vmatprep.subr.mxu0 0.0
        %1854 = vmatpush1.msra.mxu0 0.0
        %1855 = vmatprep.subr.mxu0 0.0
        %1856 = vmatpush1.msra.mxu0 0.0
        %1857 = vmatprep.subr.mxu0 0.0
        %1858 = vmatpush1.msra.mxu0 0.0
        %1859 = vmatprep.subr.mxu0 0.0
        %1860 = vmatpush1.msra.mxu0 0.0
        %1861 = vmatprep.subr.mxu0 0.0
        %1862 = vmatpush1.msra.mxu0 0.0
        %1863 = vmatprep.subr.mxu0 0.0
        %1864 = vmatpush1.msra.mxu0 0.0
        %1865 = vmatprep.subr.mxu0 0.0
        %1866 = vmatpush1.msra.mxu0 0.0
        %1867 = vmatprep.mubr.f32.mxu0 0.0
        %1868 = vmatmul.mubr.f32.gmra.mrb[0].mxu0 %v1750
        %v1869 = vpop.f32.mrb[0].mxu0
        %v1870 = vadd.f32 0.0, %v1869
        %v1871 = vpop.f32.mrb[0].mxu0
        %1872 = vmatprep.mubr.f32.mxu0 0.0
        %1873 = vmatmul.mubr.f32.gmra.mrb[0].mxu0 %v1753
        %v1874 = vpop.f32.mrb[0].mxu0
        %v1875 = vadd.f32 0.0, %v1874
        %v1876 = vpop.f32.mrb[0].mxu0
        %1877 = vmatprep.mubr.f32.mxu0 0.0
        %1878 = vmatmul.mubr.f32.gmra.mrb[0].mxu0 %v1756
        %v1879 = vpop.f32.mrb[0].mxu0
        %v1880 = vadd.f32 0.0, %v1879
        %v1881 = vpop.f32.mrb[0].mxu0
        %1882 = vmatprep.mubr.f32.mxu0 0.0
        %1883 = vmatmul.mubr.f32.gmra.mrb[0].mxu0 %v1759
        %v1884 = vpop.f32.mrb[0].mxu0
        %v1885 = vadd.f32 0.0, %v1884
        %v1886 = vpop.f32.mrb[0].mxu0
        %1887 = vmatprep.mubr.f32.mxu0 0.0
        %1888 = vmatmul.mubr.f32.gmra.mrb[0].mxu0 %v1762
        %v1889 = vpop.f32.mrb[0].mxu0
        %v1890 = vadd.f32 0.0, %v1889
        %v1891 = vpop.f32.mrb[0].mxu0
        %1892 = vmatprep.mubr.f32.mxu0 0.0
        %1893 = vmatmul.mubr.f32.gmra.mrb[0].mxu0 %v1765
        %v1894 = vpop.f32.mrb[0].mxu0
        %v1895 = vadd.f32 0.0, %v1894
        %v1896 = vpop.f32.mrb[0].mxu0
        %1897 = vmatprep.mubr.f32.mxu0 0.0
        %1898 = vmatmul.mubr.f32.gmra.mrb[0].mxu0 %v1768
        %v1899 = vpop.f32.mrb[0].mxu0
        %v1900 = vadd.f32 0.0, %v1899
        %v1901 = vpop.f32.mrb[0].mxu0
        %1902 = vmatprep.mubr.f32.mxu0 0.0
        %1903 = vmatmul.mubr.f32.gmra.mrb[0].mxu0 %v1771
        %v1904 = vpop.f32.mrb[0].mxu0
        %v1905 = vadd.f32 0.0, %v1904
        %v1906 = vpop.f32.mrb[0].mxu0
        %1907 = vmatprep.mubr.f32.mxu0 0.0
        %1908 = vmatmul.mubr.f32.gmra.mrb[0].mxu0 %v1774
        %v1909 = vpop.f32.mrb[0].mxu0
        %v1910 = vadd.f32 0.0, %v1909
        %v1911 = vpop.f32.mrb[0].mxu0
        %1912 = vmatprep.mubr.f32.mxu0 0.0
        %1913 = vmatmul.mubr.f32.gmra.mrb[0].mxu0 %v1777
        %v1914 = vpop.f32.mrb[0].mxu0
        %v1915 = vadd.f32 0.0, %v1914
        %v1916 = vpop.f32.mrb[0].mxu0
        %1917 = vmatprep.mubr.f32.mxu0 0.0
        %1918 = vmatmul.mubr.f32.gmra.mrb[0].mxu0 %v1780
        %v1919 = vpop.f32.mrb[0].mxu0
        %v1920 = vadd.f32 0.0, %v1919
        %v1921 = vpop.f32.mrb[0].mxu0
        %1922 = vmatprep.mubr.f32.mxu0 0.0
        %1923 = vmatmul.mubr.f32.gmra.mrb[0].mxu0 %v1783
        %v1924 = vpop.f32.mrb[0].mxu0
        %v1925 = vadd.f32 0.0, %v1924
        %v1926 = vpop.f32.mrb[0].mxu0
        %1927 = vmatprep.mubr.f32.mxu0 0.0
        %1928 = vmatmul.mubr.f32.gmra.mrb[0].mxu0 %v1786
        %v1929 = vpop.f32.mrb[0].mxu0
        %v1930 = vadd.f32 0.0, %v1929
        %v1931 = vpop.f32.mrb[0].mxu0
        %1932 = vmatprep.mubr.f32.mxu0 0.0
        %1933 = vmatmul.mubr.f32.gmra.mrb[0].mxu0 %v1789
        %v1934 = vpop.f32.mrb[0].mxu0
        %v1935 = vadd.f32 0.0, %v1934
        %v1936 = vpop.f32.mrb[0].mxu0
        %1937 = vmatprep.mubr.f32.mxu0 0.0
        %1938 = vmatmul.mubr.f32.gmra.mrb[0].mxu0 %v1792
        %v1939 = vpop.f32.mrb[0].mxu0
        %v1940 = vadd.f32 0.0, %v1939
        %v1941 = vpop.f32.mrb[0].mxu0
        %1942 = vmatprep.mubr.f32.mxu0 0.0
        %1943 = vmatmul.mubr.f32.gmra.mrb[0].mxu0 %v1795
        %v1944 = vpop.f32.mrb[0].mxu0
        %v1945 = vadd.f32 0.0, %v1944
        %v1946 = vpop.f32.mrb[0].mxu0
        %1947 = vmatprep.mubr.f32.mxu0 0.0
        %1948 = vmatmul.mubr.f32.gmra.mrb[0].mxu0 %v1798
        %v1949 = vpop.f32.mrb[0].mxu0
        %v1950 = vadd.f32 0.0, %v1949
        %v1951 = vpop.f32.mrb[0].mxu0
        %1952 = vmatprep.mubr.f32.mxu0 0.0
        %1953 = vmatmul.mubr.f32.gmra.mrb[0].mxu0 %v1801
        %v1954 = vpop.f32.mrb[0].mxu0
        %v1955 = vadd.f32 0.0, %v1954
        %v1956 = vpop.f32.mrb[0].mxu0
        %1957 = vdwg.mxu0
        %v1958 = vadd.f32 %v1708, %v1870
        %v1959 = vadd.f32 %v1709, %v1875
        %v1960 = vadd.f32 %v1710, %v1880
        %v1961 = vadd.f32 %v1711, %v1885
        %v1962 = vadd.f32 %v1712, %v1890
        %v1963 = vadd.f32 %v1713, %v1895
        %v1964 = vadd.f32 %v1714, %v1900
        %v1965 = vadd.f32 %v1715, %v1905
        %v1966 = vadd.f32 %v1716, %v1910
        %v1967 = vadd.f32 %v1717, %v1915
        %v1968 = vadd.f32 %v1718, %v1920
        %v1969 = vadd.f32 %v1719, %v1925
        %v1970 = vadd.f32 %v1720, %v1930
        %v1971 = vadd.f32 %v1721, %v1935
        %v1972 = vadd.f32 %v1722, %v1940
        %v1973 = vadd.f32 %v1723, %v1945
        %v1974 = vadd.f32 %v1724, %v1950
        %v1975 = vadd.f32 %v1725, %v1955
        %s1976 = sadd.s32 %s1727, 1
        %s1977 = scalar_lea.vmem %s260, %s1976
        %v1978 = vld [vmem:[%s1977] sm:$0xff]
        %v1979 = vld [vmem:[%s1977 + $0x8] sm:$0xff]
        %v1980 = vld [vmem:[%s1977 + $0x10] sm:$0xff]
        %v1981 = vld [vmem:[%s1977 + $0x18] sm:$0xff]
        %v1982 = vld [vmem:[%s1977 + $0x20] sm:$0xff]
        %v1983 = vld [vmem:[%s1977 + $0x28] sm:$0xff]
        %v1984 = vld [vmem:[%s1977 + $0x30] sm:$0xff]
        %v1985 = vld [vmem:[%s1977 + $0x38] sm:$0xff]
        %v1986 = vld [vmem:[%s1977 + $0x40] sm:$0xff]
        %v1987 = vld [vmem:[%s1977 + $0x48] sm:$0xff]
        %v1988 = vld [vmem:[%s1977 + $0x50] sm:$0xff]
        %v1989 = vld [vmem:[%s1977 + $0x58] sm:$0xff]
        %v1990 = vld [vmem:[%s1977 + $0x60] sm:$0xff]
        %v1991 = vld [vmem:[%s1977 + $0x68] sm:$0xff]
        %v1992 = vld [vmem:[%s1977 + $0x70] sm:$0xff]
        %v1993 = vld [vmem:[%s1977 + $0x78] sm:$0xff]
        %v1994 = vld [vmem:[%s1977 + $0x80] sm:$0xff]
        %v1995 = vld [vmem:[%s1977 + $0x88] sm:$0xff]
        %s1996 = scalar_lea.vmem %s2, 56
        %v1997 = vld [vmem:[%s1996] sm:$0xff]
        %v1999 = vsel %vm310, %v1978, 0
        %v2002 = vsel %vm310, %v1979, 0
        %v2005 = vsel %vm310, %v1980, 0
        %v2008 = vsel %vm310, %v1981, 0
        %v2011 = vsel %vm310, %v1982, 0
        %v2014 = vsel %vm310, %v1983, 0
        %v2017 = vsel %vm310, %v1984, 0
        %v2020 = vsel %vm310, %v1985, 0
        %v2023 = vsel %vm310, %v1986, 0
        %v2026 = vsel %vm310, %v1987, 0
        %v2029 = vsel %vm310, %v1988, 0
        %v2032 = vsel %vm310, %v1989, 0
        %v2035 = vsel %vm310, %v1990, 0
        %v2038 = vsel %vm310, %v1991, 0
        %v2041 = vsel %vm310, %v1992, 0
        %v2044 = vsel %vm310, %v1993, 0
        %v2047 = vsel %vm310, %v1994, 0
        %v2050 = vsel %vm310, %v1995, 0
        %2052 = vmatprep.subr.mxu0 0.0
        %2053 = vmatpush1.msra.mxu0 %v1997
        %2054 = vmatprep.subr.mxu0 0.0
        %2055 = vmatpush1.msra.mxu0 0.0
        %2056 = vmatprep.subr.mxu0 0.0
        %2057 = vmatpush1.msra.mxu0 0.0
        %2058 = vmatprep.subr.mxu0 0.0
        %2059 = vmatpush1.msra.mxu0 0.0
        %2060 = vmatprep.subr.mxu0 0.0
        %2061 = vmatpush1.msra.mxu0 0.0
        %2062 = vmatprep.subr.mxu0 0.0
        %2063 = vmatpush1.msra.mxu0 0.0
        %2064 = vmatprep.subr.mxu0 0.0
        %2065 = vmatpush1.msra.mxu0 0.0
        %2066 = vmatprep.subr.mxu0 0.0
        %2067 = vmatpush1.msra.mxu0 0.0
        %2068 = vmatprep.subr.mxu0 0.0
        %2069 = vmatpush1.msra.mxu0 0.0
        %2070 = vmatprep.subr.mxu0 0.0
        %2071 = vmatpush1.msra.mxu0 0.0
        %2072 = vmatprep.subr.mxu0 0.0
        %2073 = vmatpush1.msra.mxu0 0.0
        %2074 = vmatprep.subr.mxu0 0.0
        %2075 = vmatpush1.msra.mxu0 0.0
        %2076 = vmatprep.subr.mxu0 0.0
        %2077 = vmatpush1.msra.mxu0 0.0
        %2078 = vmatprep.subr.mxu0 0.0
        %2079 = vmatpush1.msra.mxu0 0.0
        %2080 = vmatprep.subr.mxu0 0.0
        %2081 = vmatpush1.msra.mxu0 0.0
        %2082 = vmatprep.subr.mxu0 0.0
        %2083 = vmatpush1.msra.mxu0 0.0
        %2084 = vmatprep.subr.mxu0 0.0
        %2085 = vmatpush1.msra.mxu0 0.0
        %2086 = vmatprep.subr.mxu0 0.0
        %2087 = vmatpush1.msra.mxu0 0.0
        %2088 = vmatprep.subr.mxu0 0.0
        %2089 = vmatpush1.msra.mxu0 0.0
        %2090 = vmatprep.subr.mxu0 0.0
        %2091 = vmatpush1.msra.mxu0 0.0
        %2092 = vmatprep.subr.mxu0 0.0
        %2093 = vmatpush1.msra.mxu0 0.0
        %2094 = vmatprep.subr.mxu0 0.0
        %2095 = vmatpush1.msra.mxu0 0.0
        %2096 = vmatprep.subr.mxu0 0.0
        %2097 = vmatpush1.msra.mxu0 0.0
        %2098 = vmatprep.subr.mxu0 0.0
        %2099 = vmatpush1.msra.mxu0 0.0
        %2100 = vmatprep.subr.mxu0 0.0
        %2101 = vmatpush1.msra.mxu0 0.0
        %2102 = vmatprep.subr.mxu0 0.0
        %2103 = vmatpush1.msra.mxu0 0.0
        %2104 = vmatprep.subr.mxu0 0.0
        %2105 = vmatpush1.msra.mxu0 0.0
        %2106 = vmatprep.subr.mxu0 0.0
        %2107 = vmatpush1.msra.mxu0 0.0
        %2108 = vmatprep.subr.mxu0 0.0
        %2109 = vmatpush1.msra.mxu0 0.0
        %2110 = vmatprep.subr.mxu0 0.0
        %2111 = vmatpush1.msra.mxu0 0.0
        %2112 = vmatprep.subr.mxu0 0.0
        %2113 = vmatpush1.msra.mxu0 0.0
        %2114 = vmatprep.subr.mxu0 0.0
        %2115 = vmatpush1.msra.mxu0 0.0
        %2116 = vmatprep.mubr.f32.mxu0 0.0
        %2117 = vmatmul.mubr.f32.gmra.mrb[0].mxu0 %v1999
        %v2118 = vpop.f32.mrb[0].mxu0
        %v2119 = vadd.f32 0.0, %v2118
        %v2120 = vpop.f32.mrb[0].mxu0
        %2121 = vmatprep.mubr.f32.mxu0 0.0
        %2122 = vmatmul.mubr.f32.gmra.mrb[0].mxu0 %v2002
        %v2123 = vpop.f32.mrb[0].mxu0
        %v2124 = vadd.f32 0.0, %v2123
        %v2125 = vpop.f32.mrb[0].mxu0
        %2126 = vmatprep.mubr.f32.mxu0 0.0
        %2127 = vmatmul.mubr.f32.gmra.mrb[0].mxu0 %v2005
        %v2128 = vpop.f32.mrb[0].mxu0
        %v2129 = vadd.f32 0.0, %v2128
        %v2130 = vpop.f32.mrb[0].mxu0
        %2131 = vmatprep.mubr.f32.mxu0 0.0
        %2132 = vmatmul.mubr.f32.gmra.mrb[0].mxu0 %v2008
        %v2133 = vpop.f32.mrb[0].mxu0
        %v2134 = vadd.f32 0.0, %v2133
        %v2135 = vpop.f32.mrb[0].mxu0
        %2136 = vmatprep.mubr.f32.mxu0 0.0
        %2137 = vmatmul.mubr.f32.gmra.mrb[0].mxu0 %v2011
        %v2138 = vpop.f32.mrb[0].mxu0
        %v2139 = vadd.f32 0.0, %v2138
        %v2140 = vpop.f32.mrb[0].mxu0
        %2141 = vmatprep.mubr.f32.mxu0 0.0
        %2142 = vmatmul.mubr.f32.gmra.mrb[0].mxu0 %v2014
        %v2143 = vpop.f32.mrb[0].mxu0
        %v2144 = vadd.f32 0.0, %v2143
        %v2145 = vpop.f32.mrb[0].mxu0
        %2146 = vmatprep.mubr.f32.mxu0 0.0
        %2147 = vmatmul.mubr.f32.gmra.mrb[0].mxu0 %v2017
        %v2148 = vpop.f32.mrb[0].mxu0
        %v2149 = vadd.f32 0.0, %v2148
        %v2150 = vpop.f32.mrb[0].mxu0
        %2151 = vmatprep.mubr.f32.mxu0 0.0
        %2152 = vmatmul.mubr.f32.gmra.mrb[0].mxu0 %v2020
        %v2153 = vpop.f32.mrb[0].mxu0
        %v2154 = vadd.f32 0.0, %v2153
        %v2155 = vpop.f32.mrb[0].mxu0
        %2156 = vmatprep.mubr.f32.mxu0 0.0
        %2157 = vmatmul.mubr.f32.gmra.mrb[0].mxu0 %v2023
        %v2158 = vpop.f32.mrb[0].mxu0
        %v2159 = vadd.f32 0.0, %v2158
        %v2160 = vpop.f32.mrb[0].mxu0
        %2161 = vmatprep.mubr.f32.mxu0 0.0
        %2162 = vmatmul.mubr.f32.gmra.mrb[0].mxu0 %v2026
        %v2163 = vpop.f32.mrb[0].mxu0
        %v2164 = vadd.f32 0.0, %v2163
        %v2165 = vpop.f32.mrb[0].mxu0
        %2166 = vmatprep.mubr.f32.mxu0 0.0
        %2167 = vmatmul.mubr.f32.gmra.mrb[0].mxu0 %v2029
        %v2168 = vpop.f32.mrb[0].mxu0
        %v2169 = vadd.f32 0.0, %v2168
        %v2170 = vpop.f32.mrb[0].mxu0
        %2171 = vmatprep.mubr.f32.mxu0 0.0
        %2172 = vmatmul.mubr.f32.gmra.mrb[0].mxu0 %v2032
        %v2173 = vpop.f32.mrb[0].mxu0
        %v2174 = vadd.f32 0.0, %v2173
        %v2175 = vpop.f32.mrb[0].mxu0
        %2176 = vmatprep.mubr.f32.mxu0 0.0
        %2177 = vmatmul.mubr.f32.gmra.mrb[0].mxu0 %v2035
        %v2178 = vpop.f32.mrb[0].mxu0
        %v2179 = vadd.f32 0.0, %v2178
        %v2180 = vpop.f32.mrb[0].mxu0
        %2181 = vmatprep.mubr.f32.mxu0 0.0
        %2182 = vmatmul.mubr.f32.gmra.mrb[0].mxu0 %v2038
        %v2183 = vpop.f32.mrb[0].mxu0
        %v2184 = vadd.f32 0.0, %v2183
        %v2185 = vpop.f32.mrb[0].mxu0
        %2186 = vmatprep.mubr.f32.mxu0 0.0
        %2187 = vmatmul.mubr.f32.gmra.mrb[0].mxu0 %v2041
        %v2188 = vpop.f32.mrb[0].mxu0
        %v2189 = vadd.f32 0.0, %v2188
        %v2190 = vpop.f32.mrb[0].mxu0
        %2191 = vmatprep.mubr.f32.mxu0 0.0
        %2192 = vmatmul.mubr.f32.gmra.mrb[0].mxu0 %v2044
        %v2193 = vpop.f32.mrb[0].mxu0
        %v2194 = vadd.f32 0.0, %v2193
        %v2195 = vpop.f32.mrb[0].mxu0
        %2196 = vmatprep.mubr.f32.mxu0 0.0
        %2197 = vmatmul.mubr.f32.gmra.mrb[0].mxu0 %v2047
        %v2198 = vpop.f32.mrb[0].mxu0
        %v2199 = vadd.f32 0.0, %v2198
        %v2200 = vpop.f32.mrb[0].mxu0
        %2201 = vmatprep.mubr.f32.mxu0 0.0
        %2202 = vmatmul.mubr.f32.gmra.mrb[0].mxu0 %v2050
        %v2203 = vpop.f32.mrb[0].mxu0
        %v2204 = vadd.f32 0.0, %v2203
        %v2205 = vpop.f32.mrb[0].mxu0
        %2206 = vdwg.mxu0
        %v2207 = vadd.f32 %v1958, %v2119
        %v2208 = vadd.f32 %v1959, %v2124
        %v2209 = vadd.f32 %v1960, %v2129
        %v2210 = vadd.f32 %v1961, %v2134
        %v2211 = vadd.f32 %v1962, %v2139
        %v2212 = vadd.f32 %v1963, %v2144
        %v2213 = vadd.f32 %v1964, %v2149
        %v2214 = vadd.f32 %v1965, %v2154
        %v2215 = vadd.f32 %v1966, %v2159
        %v2216 = vadd.f32 %v1967, %v2164
        %v2217 = vadd.f32 %v1968, %v2169
        %v2218 = vadd.f32 %v1969, %v2174
        %v2219 = vadd.f32 %v1970, %v2179
        %v2220 = vadd.f32 %v1971, %v2184
        %v2221 = vadd.f32 %v1972, %v2189
        %v2222 = vadd.f32 %v1973, %v2194
        %v2223 = vadd.f32 %v1974, %v2199
        %v2224 = vadd.f32 %v1975, %v2204
        %s2225 = sadd.s32 %s1727, 2
        %s2226 = scalar_lea.vmem %s260, %s2225
        %v2227 = vld [vmem:[%s2226] sm:$0xff]
        %v2228 = vld [vmem:[%s2226 + $0x8] sm:$0xff]
        %v2229 = vld [vmem:[%s2226 + $0x10] sm:$0xff]
        %v2230 = vld [vmem:[%s2226 + $0x18] sm:$0xff]
        %v2231 = vld [vmem:[%s2226 + $0x20] sm:$0xff]
        %v2232 = vld [vmem:[%s2226 + $0x28] sm:$0xff]
        %v2233 = vld [vmem:[%s2226 + $0x30] sm:$0xff]
        %v2234 = vld [vmem:[%s2226 + $0x38] sm:$0xff]
        %v2235 = vld [vmem:[%s2226 + $0x40] sm:$0xff]
        %v2236 = vld [vmem:[%s2226 + $0x48] sm:$0xff]
        %v2237 = vld [vmem:[%s2226 + $0x50] sm:$0xff]
        %v2238 = vld [vmem:[%s2226 + $0x58] sm:$0xff]
        %v2239 = vld [vmem:[%s2226 + $0x60] sm:$0xff]
        %v2240 = vld [vmem:[%s2226 + $0x68] sm:$0xff]
        %v2241 = vld [vmem:[%s2226 + $0x70] sm:$0xff]
        %v2242 = vld [vmem:[%s2226 + $0x78] sm:$0xff]
        %v2243 = vld [vmem:[%s2226 + $0x80] sm:$0xff]
        %v2244 = vld [vmem:[%s2226 + $0x88] sm:$0xff]
        %s2245 = scalar_lea.vmem %s2, 64
        %v2246 = vld [vmem:[%s2245] sm:$0xff]
        %v2248 = vsel %vm310, %v2227, 0
        %v2251 = vsel %vm310, %v2228, 0
        %v2254 = vsel %vm310, %v2229, 0
        %v2257 = vsel %vm310, %v2230, 0
        %v2260 = vsel %vm310, %v2231, 0
        %v2263 = vsel %vm310, %v2232, 0
        %v2266 = vsel %vm310, %v2233, 0
        %v2269 = vsel %vm310, %v2234, 0
        %v2272 = vsel %vm310, %v2235, 0
        %v2275 = vsel %vm310, %v2236, 0
        %v2278 = vsel %vm310, %v2237, 0
        %v2281 = vsel %vm310, %v2238, 0
        %v2284 = vsel %vm310, %v2239, 0
        %v2287 = vsel %vm310, %v2240, 0
        %v2290 = vsel %vm310, %v2241, 0
        %v2293 = vsel %vm310, %v2242, 0
        %v2296 = vsel %vm310, %v2243, 0
        %v2299 = vsel %vm310, %v2244, 0
        %2301 = vmatprep.subr.mxu0 0.0
        %2302 = vmatpush1.msra.mxu0 %v2246
        %2303 = vmatprep.subr.mxu0 0.0
        %2304 = vmatpush1.msra.mxu0 0.0
        %2305 = vmatprep.subr.mxu0 0.0
        %2306 = vmatpush1.msra.mxu0 0.0
        %2307 = vmatprep.subr.mxu0 0.0
        %2308 = vmatpush1.msra.mxu0 0.0
        %2309 = vmatprep.subr.mxu0 0.0
        %2310 = vmatpush1.msra.mxu0 0.0
        %2311 = vmatprep.subr.mxu0 0.0
        %2312 = vmatpush1.msra.mxu0 0.0
        %2313 = vmatprep.subr.mxu0 0.0
        %2314 = vmatpush1.msra.mxu0 0.0
        %2315 = vmatprep.subr.mxu0 0.0
        %2316 = vmatpush1.msra.mxu0 0.0
        %2317 = vmatprep.subr.mxu0 0.0
        %2318 = vmatpush1.msra.mxu0 0.0
        %2319 = vmatprep.subr.mxu0 0.0
        %2320 = vmatpush1.msra.mxu0 0.0
        %2321 = vmatprep.subr.mxu0 0.0
        %2322 = vmatpush1.msra.mxu0 0.0
        %2323 = vmatprep.subr.mxu0 0.0
        %2324 = vmatpush1.msra.mxu0 0.0
        %2325 = vmatprep.subr.mxu0 0.0
        %2326 = vmatpush1.msra.mxu0 0.0
        %2327 = vmatprep.subr.mxu0 0.0
        %2328 = vmatpush1.msra.mxu0 0.0
        %2329 = vmatprep.subr.mxu0 0.0
        %2330 = vmatpush1.msra.mxu0 0.0
        %2331 = vmatprep.subr.mxu0 0.0
        %2332 = vmatpush1.msra.mxu0 0.0
        %2333 = vmatprep.subr.mxu0 0.0
        %2334 = vmatpush1.msra.mxu0 0.0
        %2335 = vmatprep.subr.mxu0 0.0
        %2336 = vmatpush1.msra.mxu0 0.0
        %2337 = vmatprep.subr.mxu0 0.0
        %2338 = vmatpush1.msra.mxu0 0.0
        %2339 = vmatprep.subr.mxu0 0.0
        %2340 = vmatpush1.msra.mxu0 0.0
        %2341 = vmatprep.subr.mxu0 0.0
        %2342 = vmatpush1.msra.mxu0 0.0
        %2343 = vmatprep.subr.mxu0 0.0
        %2344 = vmatpush1.msra.mxu0 0.0
        %2345 = vmatprep.subr.mxu0 0.0
        %2346 = vmatpush1.msra.mxu0 0.0
        %2347 = vmatprep.subr.mxu0 0.0
        %2348 = vmatpush1.msra.mxu0 0.0
        %2349 = vmatprep.subr.mxu0 0.0
        %2350 = vmatpush1.msra.mxu0 0.0
        %2351 = vmatprep.subr.mxu0 0.0
        %2352 = vmatpush1.msra.mxu0 0.0
        %2353 = vmatprep.subr.mxu0 0.0
        %2354 = vmatpush1.msra.mxu0 0.0
        %2355 = vmatprep.subr.mxu0 0.0
        %2356 = vmatpush1.msra.mxu0 0.0
        %2357 = vmatprep.subr.mxu0 0.0
        %2358 = vmatpush1.msra.mxu0 0.0
        %2359 = vmatprep.subr.mxu0 0.0
        %2360 = vmatpush1.msra.mxu0 0.0
        %2361 = vmatprep.subr.mxu0 0.0
        %2362 = vmatpush1.msra.mxu0 0.0
        %2363 = vmatprep.subr.mxu0 0.0
        %2364 = vmatpush1.msra.mxu0 0.0
        %2365 = vmatprep.mubr.f32.mxu0 0.0
        %2366 = vmatmul.mubr.f32.gmra.mrb[0].mxu0 %v2248
        %v2367 = vpop.f32.mrb[0].mxu0
        %v2368 = vadd.f32 0.0, %v2367
        %v2369 = vpop.f32.mrb[0].mxu0
        %2370 = vmatprep.mubr.f32.mxu0 0.0
        %2371 = vmatmul.mubr.f32.gmra.mrb[0].mxu0 %v2251
        %v2372 = vpop.f32.mrb[0].mxu0
        %v2373 = vadd.f32 0.0, %v2372
        %v2374 = vpop.f32.mrb[0].mxu0
        %2375 = vmatprep.mubr.f32.mxu0 0.0
        %2376 = vmatmul.mubr.f32.gmra.mrb[0].mxu0 %v2254
        %v2377 = vpop.f32.mrb[0].mxu0
        %v2378 = vadd.f32 0.0, %v2377
        %v2379 = vpop.f32.mrb[0].mxu0
        %2380 = vmatprep.mubr.f32.mxu0 0.0
        %2381 = vmatmul.mubr.f32.gmra.mrb[0].mxu0 %v2257
        %v2382 = vpop.f32.mrb[0].mxu0
        %v2383 = vadd.f32 0.0, %v2382
        %v2384 = vpop.f32.mrb[0].mxu0
        %2385 = vmatprep.mubr.f32.mxu0 0.0
        %2386 = vmatmul.mubr.f32.gmra.mrb[0].mxu0 %v2260
        %v2387 = vpop.f32.mrb[0].mxu0
        %v2388 = vadd.f32 0.0, %v2387
        %v2389 = vpop.f32.mrb[0].mxu0
        %2390 = vmatprep.mubr.f32.mxu0 0.0
        %2391 = vmatmul.mubr.f32.gmra.mrb[0].mxu0 %v2263
        %v2392 = vpop.f32.mrb[0].mxu0
        %v2393 = vadd.f32 0.0, %v2392
        %v2394 = vpop.f32.mrb[0].mxu0
        %2395 = vmatprep.mubr.f32.mxu0 0.0
        %2396 = vmatmul.mubr.f32.gmra.mrb[0].mxu0 %v2266
        %v2397 = vpop.f32.mrb[0].mxu0
        %v2398 = vadd.f32 0.0, %v2397
        %v2399 = vpop.f32.mrb[0].mxu0
        %2400 = vmatprep.mubr.f32.mxu0 0.0
        %2401 = vmatmul.mubr.f32.gmra.mrb[0].mxu0 %v2269
        %v2402 = vpop.f32.mrb[0].mxu0
        %v2403 = vadd.f32 0.0, %v2402
        %v2404 = vpop.f32.mrb[0].mxu0
        %2405 = vmatprep.mubr.f32.mxu0 0.0
        %2406 = vmatmul.mubr.f32.gmra.mrb[0].mxu0 %v2272
        %v2407 = vpop.f32.mrb[0].mxu0
        %v2408 = vadd.f32 0.0, %v2407
        %v2409 = vpop.f32.mrb[0].mxu0
        %2410 = vmatprep.mubr.f32.mxu0 0.0
        %2411 = vmatmul.mubr.f32.gmra.mrb[0].mxu0 %v2275
        %v2412 = vpop.f32.mrb[0].mxu0
        %v2413 = vadd.f32 0.0, %v2412
        %v2414 = vpop.f32.mrb[0].mxu0
        %2415 = vmatprep.mubr.f32.mxu0 0.0
        %2416 = vmatmul.mubr.f32.gmra.mrb[0].mxu0 %v2278
        %v2417 = vpop.f32.mrb[0].mxu0
        %v2418 = vadd.f32 0.0, %v2417
        %v2419 = vpop.f32.mrb[0].mxu0
        %2420 = vmatprep.mubr.f32.mxu0 0.0
        %2421 = vmatmul.mubr.f32.gmra.mrb[0].mxu0 %v2281
        %v2422 = vpop.f32.mrb[0].mxu0
        %v2423 = vadd.f32 0.0, %v2422
        %v2424 = vpop.f32.mrb[0].mxu0
        %2425 = vmatprep.mubr.f32.mxu0 0.0
        %2426 = vmatmul.mubr.f32.gmra.mrb[0].mxu0 %v2284
        %v2427 = vpop.f32.mrb[0].mxu0
        %v2428 = vadd.f32 0.0, %v2427
        %v2429 = vpop.f32.mrb[0].mxu0
        %2430 = vmatprep.mubr.f32.mxu0 0.0
        %2431 = vmatmul.mubr.f32.gmra.mrb[0].mxu0 %v2287
        %v2432 = vpop.f32.mrb[0].mxu0
        %v2433 = vadd.f32 0.0, %v2432
        %v2434 = vpop.f32.mrb[0].mxu0
        %2435 = vmatprep.mubr.f32.mxu0 0.0
        %2436 = vmatmul.mubr.f32.gmra.mrb[0].mxu0 %v2290
        %v2437 = vpop.f32.mrb[0].mxu0
        %v2438 = vadd.f32 0.0, %v2437
        %v2439 = vpop.f32.mrb[0].mxu0
        %2440 = vmatprep.mubr.f32.mxu0 0.0
        %2441 = vmatmul.mubr.f32.gmra.mrb[0].mxu0 %v2293
        %v2442 = vpop.f32.mrb[0].mxu0
        %v2443 = vadd.f32 0.0, %v2442
        %v2444 = vpop.f32.mrb[0].mxu0
        %2445 = vmatprep.mubr.f32.mxu0 0.0
        %2446 = vmatmul.mubr.f32.gmra.mrb[0].mxu0 %v2296
        %v2447 = vpop.f32.mrb[0].mxu0
        %v2448 = vadd.f32 0.0, %v2447
        %v2449 = vpop.f32.mrb[0].mxu0
        %2450 = vmatprep.mubr.f32.mxu0 0.0
        %2451 = vmatmul.mubr.f32.gmra.mrb[0].mxu0 %v2299
        %v2452 = vpop.f32.mrb[0].mxu0
        %v2453 = vadd.f32 0.0, %v2452
        %v2454 = vpop.f32.mrb[0].mxu0
        %2455 = vdwg.mxu0
        %v2456 = vadd.f32 %v2207, %v2368
        %v2457 = vadd.f32 %v2208, %v2373
        %v2458 = vadd.f32 %v2209, %v2378
        %v2459 = vadd.f32 %v2210, %v2383
        %v2460 = vadd.f32 %v2211, %v2388
        %v2461 = vadd.f32 %v2212, %v2393
        %v2462 = vadd.f32 %v2213, %v2398
        %v2463 = vadd.f32 %v2214, %v2403
        %v2464 = vadd.f32 %v2215, %v2408
        %v2465 = vadd.f32 %v2216, %v2413
        %v2466 = vadd.f32 %v2217, %v2418
        %v2467 = vadd.f32 %v2218, %v2423
        %v2468 = vadd.f32 %v2219, %v2428
        %v2469 = vadd.f32 %v2220, %v2433
        %v2470 = vadd.f32 %v2221, %v2438
        %v2471 = vadd.f32 %v2222, %v2443
        %v2472 = vadd.f32 %v2223, %v2448
        %v2473 = vadd.f32 %v2224, %v2453
        %v2474 = vld [vmem:[%s3] sm:$0x1]
        %v2476 = vlaneseq
        %v2477 = vshrl.u32 %v2476, 7
        %v2478 = vsub.s32 0, %v2477
        %v2479 = vrot.slane %v2474, %v2478
        %v2481 = vadd.f32 %v2456, %v2479
        %v2482 = vadd.f32 %v2457, %v2479
        %v2483 = vadd.f32 %v2458, %v2479
        %v2484 = vadd.f32 %v2459, %v2479
        %v2485 = vadd.f32 %v2460, %v2479
        %v2486 = vadd.f32 %v2461, %v2479
        %v2487 = vadd.f32 %v2462, %v2479
        %v2488 = vadd.f32 %v2463, %v2479
        %v2489 = vadd.f32 %v2464, %v2479
        %v2490 = vadd.f32 %v2465, %v2479
        %v2491 = vadd.f32 %v2466, %v2479
        %v2492 = vadd.f32 %v2467, %v2479
        %v2493 = vadd.f32 %v2468, %v2479
        %v2494 = vadd.f32 %v2469, %v2479
        %v2495 = vadd.f32 %v2470, %v2479
        %v2496 = vadd.f32 %v2471, %v2479
        %v2497 = vadd.f32 %v2472, %v2479
        %v2498 = vadd.f32 %v2473, %v2479
        %v2499 = vmax.f32 %v2481, 0.0
        %v2500 = vmax.f32 %v2482, 0.0
        %v2501 = vmax.f32 %v2483, 0.0
        %v2502 = vmax.f32 %v2484, 0.0
        %v2503 = vmax.f32 %v2485, 0.0
        %v2504 = vmax.f32 %v2486, 0.0
        %v2505 = vmax.f32 %v2487, 0.0
        %v2506 = vmax.f32 %v2488, 0.0
        %v2507 = vmax.f32 %v2489, 0.0
        %v2508 = vmax.f32 %v2490, 0.0
        %v2509 = vmax.f32 %v2491, 0.0
        %v2510 = vmax.f32 %v2492, 0.0
        %v2511 = vmax.f32 %v2493, 0.0
        %v2512 = vmax.f32 %v2494, 0.0
        %v2513 = vmax.f32 %v2495, 0.0
        %v2514 = vmax.f32 %v2496, 0.0
        %v2515 = vmax.f32 %v2497, 0.0
        %v2516 = vmax.f32 %v2498, 0.0
        %v2517 = vld [vmem:[#allocation2] sm:$0x1]
        %v2518 = vld [vmem:[%s1] sm:$0xff]
        %v2519 = vld [vmem:[%s1 + $0x8] sm:$0xff]
        %v2520 = vld [vmem:[%s1 + $0x10] sm:$0xff]
        %v2521 = vld [vmem:[%s1 + $0x18] sm:$0xff]
        %v2522 = vld [vmem:[%s1 + $0x20] sm:$0xff]
        %v2523 = vld [vmem:[%s1 + $0x28] sm:$0xff]
        %v2524 = vld [vmem:[%s1 + $0x30] sm:$0xff]
        %v2525 = vld [vmem:[%s1 + $0x38] sm:$0xff]
        %v2526 = vld [vmem:[%s1 + $0x40] sm:$0xff]
        %v2527 = vld [vmem:[%s1 + $0x48] sm:$0xff]
        %v2528 = vld [vmem:[%s1 + $0x50] sm:$0xff]
        %v2529 = vld [vmem:[%s1 + $0x58] sm:$0xff]
        %v2530 = vld [vmem:[%s1 + $0x60] sm:$0xff]
        %v2531 = vld [vmem:[%s1 + $0x68] sm:$0xff]
        %v2532 = vld [vmem:[%s1 + $0x70] sm:$0xff]
        %v2533 = vld [vmem:[%s1 + $0x78] sm:$0xff]
        %v2534 = vld [vmem:[%s1 + $0x80] sm:$0xff]
        %v2535 = vld [vmem:[%s1 + $0x88] sm:$0xff]
        %2537 = vset.pattern.permute.xlu0 0
        %2538 = vperm.xlu0 %2537, %v2518
        %v2539 = vpop.permute.xlu0 %2538
        %2542 = vset.pattern.permute.xlu0 0
        %2543 = vperm.xlu0 %2542, %v2519
        %v2544 = vpop.permute.xlu0 %2543
        %2547 = vset.pattern.permute.xlu0 0
        %2548 = vperm.xlu0 %2547, %v2520
        %v2549 = vpop.permute.xlu0 %2548
        %2552 = vset.pattern.permute.xlu0 0
        %2553 = vperm.xlu0 %2552, %v2521
        %v2554 = vpop.permute.xlu0 %2553
        %2557 = vset.pattern.permute.xlu0 0
        %2558 = vperm.xlu0 %2557, %v2522
        %v2559 = vpop.permute.xlu0 %2558
        %2562 = vset.pattern.permute.xlu0 0
        %2563 = vperm.xlu0 %2562, %v2523
        %v2564 = vpop.permute.xlu0 %2563
        %2567 = vset.pattern.permute.xlu0 0
        %2568 = vperm.xlu0 %2567, %v2524
        %v2569 = vpop.permute.xlu0 %2568
        %2572 = vset.pattern.permute.xlu0 0
        %2573 = vperm.xlu0 %2572, %v2525
        %v2574 = vpop.permute.xlu0 %2573
        %2577 = vset.pattern.permute.xlu0 0
        %2578 = vperm.xlu0 %2577, %v2526
        %v2579 = vpop.permute.xlu0 %2578
        %2582 = vset.pattern.permute.xlu0 0
        %2583 = vperm.xlu0 %2582, %v2527
        %v2584 = vpop.permute.xlu0 %2583
        %2587 = vset.pattern.permute.xlu0 0
        %2588 = vperm.xlu0 %2587, %v2528
        %v2589 = vpop.permute.xlu0 %2588
        %2592 = vset.pattern.permute.xlu0 0
        %2593 = vperm.xlu0 %2592, %v2529
        %v2594 = vpop.permute.xlu0 %2593
        %2597 = vset.pattern.permute.xlu0 0
        %2598 = vperm.xlu0 %2597, %v2530
        %v2599 = vpop.permute.xlu0 %2598
        %2602 = vset.pattern.permute.xlu0 0
        %2603 = vperm.xlu0 %2602, %v2531
        %v2604 = vpop.permute.xlu0 %2603
        %2607 = vset.pattern.permute.xlu0 0
        %2608 = vperm.xlu0 %2607, %v2532
        %v2609 = vpop.permute.xlu0 %2608
        %2612 = vset.pattern.permute.xlu0 0
        %2613 = vperm.xlu0 %2612, %v2533
        %v2614 = vpop.permute.xlu0 %2613
        %2617 = vset.pattern.permute.xlu0 0
        %2618 = vperm.xlu0 %2617, %v2534
        %v2619 = vpop.permute.xlu0 %2618
        %2622 = vset.pattern.permute.xlu0 0
        %2623 = vperm.xlu0 %2622, %v2535
        %v2624 = vpop.permute.xlu0 %2623
        %v2626 = vmul.f32 %v2499, %v2539
        %v2627 = vmul.f32 %v2500, %v2544
        %v2628 = vmul.f32 %v2501, %v2549
        %v2629 = vmul.f32 %v2502, %v2554
        %v2630 = vmul.f32 %v2503, %v2559
        %v2631 = vmul.f32 %v2504, %v2564
        %v2632 = vmul.f32 %v2505, %v2569
        %v2633 = vmul.f32 %v2506, %v2574
        %v2634 = vmul.f32 %v2507, %v2579
        %v2635 = vmul.f32 %v2508, %v2584
        %v2636 = vmul.f32 %v2509, %v2589
        %v2637 = vmul.f32 %v2510, %v2594
        %v2638 = vmul.f32 %v2511, %v2599
        %v2639 = vmul.f32 %v2512, %v2604
        %v2640 = vmul.f32 %v2513, %v2609
        %v2641 = vmul.f32 %v2514, %v2614
        %v2642 = vmul.f32 %v2515, %v2619
        %v2643 = vmul.f32 %v2516, %v2624
        %v2644 = vadd.f32 %v2626, %v2627
        %v2645 = vadd.f32 %v2644, %v2628
        %v2646 = vadd.f32 %v2645, %v2629
        %v2647 = vadd.f32 %v2646, %v2630
        %v2648 = vadd.f32 %v2647, %v2631
        %v2649 = vadd.f32 %v2648, %v2632
        %v2650 = vadd.f32 %v2649, %v2633
        %v2651 = vadd.f32 %v2650, %v2634
        %v2652 = vadd.f32 %v2651, %v2635
        %v2653 = vadd.f32 %v2652, %v2636
        %v2654 = vadd.f32 %v2653, %v2637
        %v2655 = vadd.f32 %v2654, %v2638
        %v2656 = vadd.f32 %v2655, %v2639
        %v2657 = vadd.f32 %v2656, %v2640
        %v2658 = vadd.f32 %v2657, %v2641
        %v2659 = vadd.f32 %v2658, %v2642
        %v2660 = vadd.f32 %v2659, %v2643
        %v2661 = vrot.slane %v2660, 4
        %v2662 = vadd.f32 %v2660, %v2661
        %v2663 = vrot.slane %v2662, 2
        %v2664 = vadd.f32 %v2662, %v2663
        %v2665 = vrot.slane %v2664, 1
        %v2666 = vadd.f32 %v2664, %v2665
        %v2667 = vadd.f32 %v2517, %v2666
        %2668 = vst [vmem:[#allocation2] sm:$0x1] %v2667
        %p2669 = scmp.eq.s32.totalorder %s25, 1
        // Predicated region
        $region49: #{tpu_custom_call.1} parent=43 // pred_check
          %p2670 = pneg %p2669
        $region50: #{tpu_custom_call.1} parent=43 // pred_check_branch
          %2672 = sbr.rel (%p2670) target = $region52
        $region51: #{tpu_custom_call.1} parent=43 // pred_region
          %v2673 = vld [vmem:[#allocation2] sm:$0x1]
          %v2674 = vmul.f32 %v2673, 0.00390625
          %v2675 = vld [vmem:[%s4] sm:$0xff]
          %v2676 = vld [vmem:[%s4 + $0x8] sm:$0xff]
          %v2677 = vld [vmem:[%s4 + $0x10] sm:$0xff]
          %v2678 = vld [vmem:[%s4 + $0x18] sm:$0xff]
          %v2679 = vld [vmem:[%s4 + $0x20] sm:$0xff]
          %v2680 = vld [vmem:[%s4 + $0x28] sm:$0xff]
          %v2681 = vld [vmem:[%s4 + $0x30] sm:$0xff]
          %v2682 = vld [vmem:[%s4 + $0x38] sm:$0xff]
          %v2683 = vld [vmem:[%s4 + $0x40] sm:$0xff]
          %v2684 = vld [vmem:[%s4 + $0x48] sm:$0xff]
          %v2685 = vld [vmem:[%s4 + $0x50] sm:$0xff]
          %v2686 = vld [vmem:[%s4 + $0x58] sm:$0xff]
          %v2687 = vld [vmem:[%s4 + $0x60] sm:$0xff]
          %v2688 = vld [vmem:[%s4 + $0x68] sm:$0xff]
          %v2689 = vld [vmem:[%s4 + $0x70] sm:$0xff]
          %v2690 = vld [vmem:[%s4 + $0x78] sm:$0xff]
          %v2691 = vld [vmem:[%s5] sm:$0x1]
          %2692 = vmatprep.subr.mxu0 0.0
          %2693 = vmatpush1.msra.mxu0 %v2675
          %2694 = vmatprep.subr.mxu0 0.0
          %2695 = vmatpush1.msra.mxu0 %v2676
          %2696 = vmatprep.subr.mxu0 0.0
          %2697 = vmatpush1.msra.mxu0 %v2677
          %2698 = vmatprep.subr.mxu0 0.0
          %2699 = vmatpush1.msra.mxu0 %v2678
          %2700 = vmatprep.subr.mxu0 0.0
          %2701 = vmatpush1.msra.mxu0 %v2679
          %2702 = vmatprep.subr.mxu0 0.0
          %2703 = vmatpush1.msra.mxu0 %v2680
          %2704 = vmatprep.subr.mxu0 0.0
          %2705 = vmatpush1.msra.mxu0 %v2681
          %2706 = vmatprep.subr.mxu0 0.0
          %2707 = vmatpush1.msra.mxu0 %v2682
          %2708 = vmatprep.subr.mxu0 0.0
          %2709 = vmatpush1.msra.mxu0 %v2683
          %2710 = vmatprep.subr.mxu0 0.0
          %2711 = vmatpush1.msra.mxu0 %v2684
          %2712 = vmatprep.subr.mxu0 0.0
          %2713 = vmatpush1.msra.mxu0 %v2685
          %2714 = vmatprep.subr.mxu0 0.0
          %2715 = vmatpush1.msra.mxu0 %v2686
          %2716 = vmatprep.subr.mxu0 0.0
          %2717 = vmatpush1.msra.mxu0 %v2687
          %2718 = vmatprep.subr.mxu0 0.0
          %2719 = vmatpush1.msra.mxu0 %v2688
          %2720 = vmatprep.subr.mxu0 0.0
          %2721 = vmatpush1.msra.mxu0 %v2689
          %2722 = vmatprep.subr.mxu0 0.0
          %2723 = vmatpush1.msra.mxu0 %v2690
          %2724 = vmatprep.subr.mxu0 0.0
          %2725 = vmatpush1.msra.mxu0 0.0
          %2726 = vmatprep.subr.mxu0 0.0
          %2727 = vmatpush1.msra.mxu0 0.0
          %2728 = vmatprep.subr.mxu0 0.0
          %2729 = vmatpush1.msra.mxu0 0.0
          %2730 = vmatprep.subr.mxu0 0.0
          %2731 = vmatpush1.msra.mxu0 0.0
          %2732 = vmatprep.subr.mxu0 0.0
          %2733 = vmatpush1.msra.mxu0 0.0
          %2734 = vmatprep.subr.mxu0 0.0
          %2735 = vmatpush1.msra.mxu0 0.0
          %2736 = vmatprep.subr.mxu0 0.0
          %2737 = vmatpush1.msra.mxu0 0.0
          %2738 = vmatprep.subr.mxu0 0.0
          %2739 = vmatpush1.msra.mxu0 0.0
          %2740 = vmatprep.subr.mxu0 0.0
          %2741 = vmatpush1.msra.mxu0 0.0
          %2742 = vmatprep.subr.mxu0 0.0
          %2743 = vmatpush1.msra.mxu0 0.0
          %2744 = vmatprep.subr.mxu0 0.0
          %2745 = vmatpush1.msra.mxu0 0.0
          %2746 = vmatprep.subr.mxu0 0.0
          %2747 = vmatpush1.msra.mxu0 0.0
          %2748 = vmatprep.subr.mxu0 0.0
          %2749 = vmatpush1.msra.mxu0 0.0
          %2750 = vmatprep.subr.mxu0 0.0
          %2751 = vmatpush1.msra.mxu0 0.0
          %2752 = vmatprep.subr.mxu0 0.0
          %2753 = vmatpush1.msra.mxu0 0.0
          %2754 = vmatprep.subr.mxu0 0.0
          %2755 = vmatpush1.msra.mxu0 0.0
          %2756 = vmatprep.mubr.f32.mxu0 0.0
          %2757 = vmatmul.mubr.f32.gmra.mrb[0].mxu0 %v2674
          %v2758 = vpop.f32.mrb[0].mxu0
          %v2759 = vadd.f32 %v2691, %v2758
          %v2760 = vpop.f32.mrb[0].mxu0
          %2761 = vdwg.mxu0
          %2762 = vst [vmem:[%s255] sm:$0x1] %v2759
        $region52: #{tpu_custom_call.1} parent=43 // pred_fallthru
          _
        %s2763 = sand.u32 %s171, 1
        %s2764 = scalar_lea.sflag [#allocation4], %s2763
        %s2765 = sand.u32 %s171, 1
        %s2766 = scalar_lea.vmem [#allocation3], %s2765
        // Predicated region
        $region53: #{tpu_custom_call.1} parent=43 // pred_check
          %p2767 = pneg %p181
        $region54: #{tpu_custom_call.1} parent=43 // pred_check_branch
          %2769 = sbr.rel (%p2767) target = $region56
        $region55: #{tpu_custom_call.1} parent=43 // pred_region
          %s2771 = ssub.s32 16, 16
          %2772 = vsyncadd %s2764, %s2771
          %s2773 = smul.addr %s24, 16
          %s2774 = scalar_lea.hbm %s6, %s2773
          %s2776 = sshll.u32 %s2766, 4
          %s2777 = int_to_ptr.vmem [resolvable:$true] %s2776
          %2779 = dma.vmem_to_hbm [thread:$0]  %s2777, 16, %s2774, %s2764
        $region56: #{tpu_custom_call.1} parent=43 // pred_fallthru
          _
      $region44: #{tpu_custom_call.1} parent=5 // pred_fallthru
        _
      %p2780 = scmp.le.s32.totalorder 2, %s15
      // Predicated region
      $region57: #{tpu_custom_call.1} parent=5 // pred_check
        %p2781 = pneg %p2780
      $region58: #{tpu_custom_call.1} parent=5 // pred_check_branch
        %2783 = sbr.rel (%p2781) target = $region60
      $region59: #{tpu_custom_call.1} parent=5 // pred_region
        %s2784 = ssub.s32 %s15, 2
        // Predicated region
        $region61: #{tpu_custom_call.1} parent=59 // pred_check
          %p2785 = pneg %p187
        $region62: #{tpu_custom_call.1} parent=59 // pred_check_branch
          %2787 = sbr.rel (%p2785) target = $region64
        $region63: #{tpu_custom_call.1} parent=59 // pred_region
          %s2788 = sand.u32 %s172, 1
          %s2789 = scalar_lea.sflag [#allocation4], %s2788
          %s2790 = sand.u32 %s172, 1
          %s2791 = scalar_lea.vmem [#allocation3], %s2790
          %2792 = dma.done %s2789, 16
        $region64: #{tpu_custom_call.1} parent=59 // pred_fallthru
          _
      $region60: #{tpu_custom_call.1} parent=5 // pred_fallthru
        _
    $region6: #{tpu_custom_call.1} parent=1 // loop_footer
      %s19 = sadd.s32 1, %s15
    $region7: #{tpu_custom_call.1} parent=1 // loop_footer_branch
      %14 = sbr.rel target = $region3
    $region8: #{tpu_custom_call.1} parent=1 // loop_exit
      _
    %2793 = vsyncpa [#allocation4], 1
    %s2794 = scalar_lea.sflag [#allocation4], 1
    %2795 = vsyncpa %s2794, 1

</llo_original>
